<compile_context>
chip_gen: v7x
topology: tpu7x:2x2x1
jax: 0.10.0
libtpu: 0.0.40
codegen_flags: <defaults>
</compile_context>

<pallas_src>
import jax
import jax.numpy as jnp
from jax.experimental import pallas as pl
from jax.experimental.pallas import tpu as pltpu

HIDDEN = 32    # hidden_size
LAYERS = 2     # layers
INPUT = 3      # input_size
OUTPUT = 2     # output_size
SEQ = 8        # sequence length
TIMESTEPS = 1  # LSTM "batch" dim (module's timesteps)

# bf16 weight-slab row offsets (all multiples of 16 = bf16 sublane tile).
_W0IN_R0, _W0IN_R1 = 0, 16      # fused embed->layer0-gates weight (rows 0..2 real)
_WHH0_R0, _WHH0_R1 = 16, 48     # layer-0 recurrent weight  (H, 4H)
_WIH1_R0, _WIH1_R1 = 48, 80     # layer-1 input weight      (H, 4H)
_WHH1_R0, _WHH1_R1 = 80, 112    # layer-1 recurrent weight  (H, 4H)
_WOUT_R0, _WOUT_R1 = 112, 144   # output-head logit-diff column (lane 0)
_WSLAB_ROWS = 144
_OBS_PAD = _W0IN_R1 - _W0IN_R0  # obs padded to 16 cols to match the W0in block


def simple_rnn_kernel(obs_ref, w_ref, s_ref, out_ref, hseq_ref):
    H = HIDDEN
    S = SEQ

    # --- weights (bf16), loaded once from the packed slab ------------------
    w0in = w_ref[_W0IN_R0:_W0IN_R1, :]     # (16, 4H) fused embed->gates (rows 3.. zero)
    whh0 = w_ref[_WHH0_R0:_WHH0_R1, :]     # (H, 4H)
    wih1 = w_ref[_WIH1_R0:_WIH1_R1, :]     # (H, 4H)
    whh1 = w_ref[_WHH1_R0:_WHH1_R1, :]     # (H, 4H)
    wout = w_ref[_WOUT_R0:_WOUT_R1, :]     # (H, 4H), lane 0 = wo[0]-wo[1]

    # --- biases / initial state (f32) from the packed slab ------------------
    b0 = s_ref[0:1, :]                     # (1, 4H) fused layer-0 bias (incl. embed bias)
    b1 = s_ref[1:2, :]                     # (1, 4H)
    h0 = s_ref[2:3, 0:H]                   # (1, H) layer-0 hidden
    h1 = s_ref[3:4, 0:H]                   # (1, H) layer-1 hidden
    c0 = s_ref[4:5, 0:H]                   # (1, H) layer-0 cell
    c1 = s_ref[5:6, 0:H]                   # (1, H) layer-1 cell
    bod = s_ref[6:7, 0:1]                  # (1, 1) bo[0]-bo[1]

    # Hoisted layer-0 input projection for the whole sequence (embed already
    # algebraically folded in): one (S,16)@(16,4H) MXU op, no recurrence dep.
    pg0 = (jnp.dot(obs_ref[...], w0in, preferred_element_type=jnp.float32)
           + b0)                                                   # (S, 4H) f32

    def lstm_cell(gates, c):
        # 2 full-vreg EUP pushes, then lane-slice i/f/g/o (PyTorch gate order).
        sig = jax.nn.sigmoid(gates)
        th = jnp.tanh(gates)
        c_new = sig[:, H:2 * H] * c + sig[:, 0:H] * th[:, 2 * H:3 * H]
        h_new = sig[:, 3 * H:4 * H] * jnp.tanh(c_new)
        return h_new, c_new

    # Wavefront recurrence: layer-1 step t needs only layer-0 step t (and its
    # own t-1), so layer-0 step t+1 is independent of layer-1 step t and the
    # fully-unrolled code exposes cross-layer overlap to the scheduler.
    for t in range(S):
        # layer 0
        g0 = pg0[t:t + 1, :] + jnp.dot(h0.astype(jnp.bfloat16), whh0,
                                       preferred_element_type=jnp.float32)
        h0, c0 = lstm_cell(g0, c0)
        # layer 1 (recurrent term first: it is off the h0(t) critical path)
        g1 = (b1
              + jnp.dot(h1.astype(jnp.bfloat16), whh1,
                        preferred_element_type=jnp.float32)
              + jnp.dot(h0.astype(jnp.bfloat16), wih1,
                        preferred_element_type=jnp.float32))
        h1, c1 = lstm_cell(g1, c1)
        hseq_ref[t:t + 1, :] = h1

    # Output head: 2-class softmax == sigmoid of the logit difference.
    lin = jnp.dot(hseq_ref[...].astype(jnp.bfloat16), wout,
                  preferred_element_type=jnp.float32)              # (S, 4H), lane 0 real
    p0 = jax.nn.sigmoid(lin[:, 0:1] + bod)                         # (S, 1)
    out_ref[:, 0:1] = p0
    out_ref[:, 1:2] = 1.0 - p0


def make_params(key):
    """Parameters in PyTorch layout (out_features, in_features)."""
    ks = jax.random.split(key, 10)
    scale = 0.1
    we = scale * jax.random.normal(ks[0], (HIDDEN, INPUT), jnp.float32)
    be = scale * jax.random.normal(ks[1], (1, HIDDEN), jnp.float32)
    # All LSTM layers take H-dim inputs (embed output is H), so weights stack.
    wih = scale * jax.random.normal(ks[2], (LAYERS, 4 * HIDDEN, HIDDEN), jnp.float32)
    whh = scale * jax.random.normal(ks[3], (LAYERS, 4 * HIDDEN, HIDDEN), jnp.float32)
    b_ih = scale * jax.random.normal(ks[4], (LAYERS, 4 * HIDDEN), jnp.float32)
    b_hh = scale * jax.random.normal(ks[5], (LAYERS, 4 * HIDDEN), jnp.float32)
    b = b_ih + b_hh                                  # combined LSTM bias
    wo = scale * jax.random.normal(ks[6], (OUTPUT, HIDDEN), jnp.float32)
    bo = scale * jax.random.normal(ks[7], (1, OUTPUT), jnp.float32)
    # init_hidden(): torch.randn(layers, timesteps=1, hidden) -> squeeze batch
    h0 = jax.random.normal(ks[8], (LAYERS, HIDDEN), jnp.float32)
    c0 = jax.random.normal(ks[9], (LAYERS, HIDDEN), jnp.float32)
    return we, be, wih, whh, b, h0, c0, wo, bo


def prepare_params(params):
    """One-time packing: run OUTSIDE the per-step jitted forward.

    Returns (wslab bf16 (144,128), sslab f32 (8,128)).
    """
    assert LAYERS == 2 and 4 * HIDDEN == 128
    we, be, wih, whh, b, h0, c0, wo, bo = params

    wih0T = wih[0].T                               # (H, 4H)
    w0in = we.T @ wih0T                            # (I, 4H): embed fused into layer-0 proj
    b0f = be @ wih0T + b[0:1]                      # (1, 4H): fused layer-0 bias

    wslab = jnp.zeros((_WSLAB_ROWS, 4 * HIDDEN), jnp.float32)
    wslab = wslab.at[_W0IN_R0:_W0IN_R0 + INPUT, :].set(w0in)
    wslab = wslab.at[_WHH0_R0:_WHH0_R1, :].set(whh[0].T)
    wslab = wslab.at[_WIH1_R0:_WIH1_R1, :].set(wih[1].T)
    wslab = wslab.at[_WHH1_R0:_WHH1_R1, :].set(whh[1].T)
    wslab = wslab.at[_WOUT_R0:_WOUT_R1, 0].set(wo[0] - wo[1])
    wslab = wslab.astype(jnp.bfloat16)

    sslab = jnp.zeros((8, 4 * HIDDEN), jnp.float32)
    sslab = sslab.at[0, :].set(b0f[0])
    sslab = sslab.at[1, :].set(b[1])
    sslab = sslab.at[2, 0:HIDDEN].set(h0[0])
    sslab = sslab.at[3, 0:HIDDEN].set(h0[1])
    sslab = sslab.at[4, 0:HIDDEN].set(c0[0])
    sslab = sslab.at[5, 0:HIDDEN].set(c0[1])
    sslab = sslab.at[6, 0].set(bo[0, 0] - bo[0, 1])
    return wslab, sslab


def simple_rnn_forward(obs, wslab, sslab):
    """obs: (S, 1, INPUT) f32 -> flat softmax (S*1*OUTPUT,), like the module."""
    S = obs.shape[0]
    obs2d = obs.reshape(S, INPUT).astype(jnp.bfloat16)
    obs_pad = jnp.pad(obs2d, ((0, 0), (0, _OBS_PAD - INPUT)))       # (S, 16) bf16

    vmem = pl.BlockSpec(memory_space=pltpu.MemorySpace.VMEM)
    out = pl.pallas_call(
        simple_rnn_kernel,
        out_shape=jax.ShapeDtypeStruct((S, OUTPUT), jnp.float32),
        in_specs=[vmem, vmem, vmem],
        out_specs=vmem,
        scratch_shapes=[pltpu.VMEM((S, HIDDEN), jnp.float32)],      # layer-1 h sequence
    )(obs_pad, wslab, sslab)
    return out.reshape(-1)   # matches F.softmax(actions, dim=2).view(-1)


def reference_forward(obs, params):
    """Pure-JAX f32 reference of the PyTorch module (eval mode)."""
    we, be, wih, whh, b, h0, c0, wo, bo = params
    S = obs.shape[0]
    x = obs.reshape(S, INPUT) @ we.T + be
    h = [h0[l] for l in range(LAYERS)]
    c = [c0[l] for l in range(LAYERS)]
    for l in range(LAYERS):
        outs = []
        for t in range(S):
            g = x[t] @ wih[l].T + h[l] @ whh[l].T + b[l]
            i = jax.nn.sigmoid(g[0:HIDDEN])
            f = jax.nn.sigmoid(g[HIDDEN:2 * HIDDEN])
            gg = jnp.tanh(g[2 * HIDDEN:3 * HIDDEN])
            o = jax.nn.sigmoid(g[3 * HIDDEN:4 * HIDDEN])
            c[l] = f * c[l] + i * gg
            h[l] = o * jnp.tanh(c[l])
            outs.append(h[l])
        x = jnp.stack(outs, axis=0)
    actions = x @ wo.T + bo
    return jax.nn.softmax(actions, axis=-1).reshape(-1)


if __name__ == "__main__":
    key = jax.random.PRNGKey(0)
    pkey, xkey = jax.random.split(key)
    params = make_params(pkey)
    wslab, sslab = prepare_params(params)   # one-time, outside the jitted forward
    obs = jax.random.normal(xkey, (SEQ, TIMESTEPS, INPUT), jnp.float32)

    fwd = jax.jit(simple_rnn_forward)
    y = fwd(obs, wslab, sslab)
    jax.block_until_ready(y)

    assert y.shape == (SEQ * TIMESTEPS * OUTPUT,)
    # softmax rows must sum to 1
    row_sums = y.reshape(SEQ * TIMESTEPS, OUTPUT).sum(axis=-1)
    assert jnp.allclose(row_sums, 1.0, atol=1e-5)
    # loose-tolerance parity vs. f32 reference (kernel uses bf16 MXU operands)
    y_ref = reference_forward(obs, params)
    assert jnp.allclose(y, y_ref, atol=3e-2), float(jnp.max(jnp.abs(y - y_ref)))
    print("KERNEL_OK")
</pallas_src>

<mosaic_0001>
module attributes {stable_mosaic.version = 11 : i64} {
  func.func @simple_rnn_kernel(%arg0: memref<8x16xbf16, #tpu.memory_space<vmem>>, %arg1: memref<144x128xbf16, #tpu.memory_space<vmem>>, %arg2: memref<8x128xf32, #tpu.memory_space<vmem>>, %arg3: memref<8x2xf32, #tpu.memory_space<vmem>>, %arg4: memref<8x32xf32, #tpu.memory_space<vmem>>) attributes {dimension_semantics = [], scalar_prefetch = 0 : i64, scratch_operands = 1 : i64, tpu.core_type = #tpu.core_type<tc>} {
    %c0 = arith.constant 0 : index
    %c0_0 = arith.constant 0 : index
    %0 = vector.load %arg1[%c0, %c0_0] : memref<144x128xbf16, #tpu.memory_space<vmem>>, vector<16x128xbf16>
    %c16 = arith.constant 16 : index
    %c0_1 = arith.constant 0 : index
    %1 = vector.load %arg1[%c16, %c0_1] : memref<144x128xbf16, #tpu.memory_space<vmem>>, vector<32x128xbf16>
    %c48 = arith.constant 48 : index
    %c0_2 = arith.constant 0 : index
    %2 = vector.load %arg1[%c48, %c0_2] : memref<144x128xbf16, #tpu.memory_space<vmem>>, vector<32x128xbf16>
    %c80 = arith.constant 80 : index
    %c0_3 = arith.constant 0 : index
    %3 = vector.load %arg1[%c80, %c0_3] : memref<144x128xbf16, #tpu.memory_space<vmem>>, vector<32x128xbf16>
    %c112 = arith.constant 112 : index
    %c0_4 = arith.constant 0 : index
    %4 = vector.load %arg1[%c112, %c0_4] : memref<144x128xbf16, #tpu.memory_space<vmem>>, vector<32x128xbf16>
    %c0_5 = arith.constant 0 : index
    %c0_6 = arith.constant 0 : index
    %5 = vector.load %arg2[%c0_5, %c0_6] : memref<8x128xf32, #tpu.memory_space<vmem>>, vector<1x128xf32>
    %c1 = arith.constant 1 : index
    %c0_7 = arith.constant 0 : index
    %6 = vector.load %arg2[%c1, %c0_7] : memref<8x128xf32, #tpu.memory_space<vmem>>, vector<1x128xf32>
    %c2 = arith.constant 2 : index
    %c0_8 = arith.constant 0 : index
    %7 = vector.load %arg2[%c2, %c0_8] : memref<8x128xf32, #tpu.memory_space<vmem>>, vector<1x32xf32>
    %c3 = arith.constant 3 : index
    %c0_9 = arith.constant 0 : index
    %8 = vector.load %arg2[%c3, %c0_9] : memref<8x128xf32, #tpu.memory_space<vmem>>, vector<1x32xf32>
    %c4 = arith.constant 4 : index
    %c0_10 = arith.constant 0 : index
    %9 = vector.load %arg2[%c4, %c0_10] : memref<8x128xf32, #tpu.memory_space<vmem>>, vector<1x32xf32>
    %c5 = arith.constant 5 : index
    %c0_11 = arith.constant 0 : index
    %10 = vector.load %arg2[%c5, %c0_11] : memref<8x128xf32, #tpu.memory_space<vmem>>, vector<1x32xf32>
    %c6 = arith.constant 6 : index
    %c0_12 = arith.constant 0 : index
    %11 = vector.load %arg2[%c6, %c0_12] : memref<8x128xf32, #tpu.memory_space<vmem>>, vector<1x1xf32>
    %c0_13 = arith.constant 0 : index
    %c0_14 = arith.constant 0 : index
    %12 = vector.load %arg0[%c0_13, %c0_14] : memref<8x16xbf16, #tpu.memory_space<vmem>>, vector<8x16xbf16>
    %cst = arith.constant dense<0.000000e+00> : vector<8x128xf32>
    %13 = tpu.matmul %12, %0, %cst {dimension_numbers = #tpu.dot_dimension_numbers<[1], [0], [0], [1], [0, 0, 1, 1], [], []>} : vector<8x16xbf16>, vector<16x128xbf16>, vector<8x128xf32> -> vector<8x128xf32>
    %14 = vector.broadcast %5 : vector<1x128xf32> to vector<8x128xf32>
    %15 = arith.addf %13, %14 : vector<8x128xf32>
    %16 = vector.extract_strided_slice %15 {offsets = [0, 0], sizes = [1, 128], strides = [1, 1]} : vector<8x128xf32> to vector<1x128xf32>
    %17 = arith.truncf %7 : vector<1x32xf32> to vector<1x32xbf16>
    %cst_15 = arith.constant dense<0.000000e+00> : vector<1x128xf32>
    %18 = tpu.matmul %17, %1, %cst_15 {dimension_numbers = #tpu.dot_dimension_numbers<[1], [0], [0], [1], [0, 0, 1, 1], [], []>} : vector<1x32xbf16>, vector<32x128xbf16>, vector<1x128xf32> -> vector<1x128xf32>
    %19 = arith.addf %16, %18 : vector<1x128xf32>
    %20 = arith.negf %19 : vector<1x128xf32>
    %21 = math.exp %20 : vector<1x128xf32>
    %cst_16 = arith.constant 1.000000e+00 : f32
    %22 = vector.broadcast %cst_16 : f32 to vector<1x128xf32>
    %23 = arith.addf %22, %21 : vector<1x128xf32>
    %24 = arith.divf %22, %23 : vector<1x128xf32>
    %25 = math.tanh %19 : vector<1x128xf32>
    %26 = vector.extract_strided_slice %24 {offsets = [0, 32], sizes = [1, 32], strides = [1, 1]} : vector<1x128xf32> to vector<1x32xf32>
    %27 = arith.mulf %26, %9 : vector<1x32xf32>
    %28 = vector.extract_strided_slice %24 {offsets = [0, 0], sizes = [1, 32], strides = [1, 1]} : vector<1x128xf32> to vector<1x32xf32>
    %29 = vector.extract_strided_slice %25 {offsets = [0, 64], sizes = [1, 32], strides = [1, 1]} : vector<1x128xf32> to vector<1x32xf32>
    %30 = arith.mulf %28, %29 : vector<1x32xf32>
    %31 = arith.addf %27, %30 : vector<1x32xf32>
    %32 = vector.extract_strided_slice %24 {offsets = [0, 96], sizes = [1, 32], strides = [1, 1]} : vector<1x128xf32> to vector<1x32xf32>
    %33 = math.tanh %31 : vector<1x32xf32>
    %34 = arith.mulf %32, %33 : vector<1x32xf32>
    %35 = arith.truncf %8 : vector<1x32xf32> to vector<1x32xbf16>
    %cst_17 = arith.constant dense<0.000000e+00> : vector<1x128xf32>
    %36 = tpu.matmul %35, %3, %cst_17 {dimension_numbers = #tpu.dot_dimension_numbers<[1], [0], [0], [1], [0, 0, 1, 1], [], []>} : vector<1x32xbf16>, vector<32x128xbf16>, vector<1x128xf32> -> vector<1x128xf32>
    %37 = arith.addf %6, %36 : vector<1x128xf32>
    %38 = arith.truncf %34 : vector<1x32xf32> to vector<1x32xbf16>
    %cst_18 = arith.constant dense<0.000000e+00> : vector<1x128xf32>
    %39 = tpu.matmul %38, %2, %cst_18 {dimension_numbers = #tpu.dot_dimension_numbers<[1], [0], [0], [1], [0, 0, 1, 1], [], []>} : vector<1x32xbf16>, vector<32x128xbf16>, vector<1x128xf32> -> vector<1x128xf32>
    %40 = arith.addf %37, %39 : vector<1x128xf32>
    %41 = arith.negf %40 : vector<1x128xf32>
    %42 = math.exp %41 : vector<1x128xf32>
    %cst_19 = arith.constant 1.000000e+00 : f32
    %43 = vector.broadcast %cst_19 : f32 to vector<1x128xf32>
    %44 = arith.addf %43, %42 : vector<1x128xf32>
    %45 = arith.divf %43, %44 : vector<1x128xf32>
    %46 = math.tanh %40 : vector<1x128xf32>
    %47 = vector.extract_strided_slice %45 {offsets = [0, 32], sizes = [1, 32], strides = [1, 1]} : vector<1x128xf32> to vector<1x32xf32>
    %48 = arith.mulf %47, %10 : vector<1x32xf32>
    %49 = vector.extract_strided_slice %45 {offsets = [0, 0], sizes = [1, 32], strides = [1, 1]} : vector<1x128xf32> to vector<1x32xf32>
    %50 = vector.extract_strided_slice %46 {offsets = [0, 64], sizes = [1, 32], strides = [1, 1]} : vector<1x128xf32> to vector<1x32xf32>
    %51 = arith.mulf %49, %50 : vector<1x32xf32>
    %52 = arith.addf %48, %51 : vector<1x32xf32>
    %53 = vector.extract_strided_slice %45 {offsets = [0, 96], sizes = [1, 32], strides = [1, 1]} : vector<1x128xf32> to vector<1x32xf32>
    %54 = math.tanh %52 : vector<1x32xf32>
    %55 = arith.mulf %53, %54 : vector<1x32xf32>
    %c0_20 = arith.constant 0 : index
    %c0_21 = arith.constant 0 : index
    %56 = vector.load %arg4[%c0_20, %c0_21] : memref<8x32xf32, #tpu.memory_space<vmem>>, vector<1x32xf32>
    tpu.vector_store %arg4[%c0_20, %c0_21], %55 {strides = array<i32>} : memref<8x32xf32, #tpu.memory_space<vmem>>, vector<1x32xf32>,
    %57 = vector.extract_strided_slice %15 {offsets = [1, 0], sizes = [1, 128], strides = [1, 1]} : vector<8x128xf32> to vector<1x128xf32>
    %58 = arith.truncf %34 : vector<1x32xf32> to vector<1x32xbf16>
    %cst_22 = arith.constant dense<0.000000e+00> : vector<1x128xf32>
    %59 = tpu.matmul %58, %1, %cst_22 {dimension_numbers = #tpu.dot_dimension_numbers<[1], [0], [0], [1], [0, 0, 1, 1], [], []>} : vector<1x32xbf16>, vector<32x128xbf16>, vector<1x128xf32> -> vector<1x128xf32>
    %60 = arith.addf %57, %59 : vector<1x128xf32>
    %61 = arith.negf %60 : vector<1x128xf32>
    %62 = math.exp %61 : vector<1x128xf32>
    %cst_23 = arith.constant 1.000000e+00 : f32
    %63 = vector.broadcast %cst_23 : f32 to vector<1x128xf32>
    %64 = arith.addf %63, %62 : vector<1x128xf32>
    %65 = arith.divf %63, %64 : vector<1x128xf32>
    %66 = math.tanh %60 : vector<1x128xf32>
    %67 = vector.extract_strided_slice %65 {offsets = [0, 32], sizes = [1, 32], strides = [1, 1]} : vector<1x128xf32> to vector<1x32xf32>
    %68 = arith.mulf %67, %31 : vector<1x32xf32>
    %69 = vector.extract_strided_slice %65 {offsets = [0, 0], sizes = [1, 32], strides = [1, 1]} : vector<1x128xf32> to vector<1x32xf32>
    %70 = vector.extract_strided_slice %66 {offsets = [0, 64], sizes = [1, 32], strides = [1, 1]} : vector<1x128xf32> to vector<1x32xf32>
    %71 = arith.mulf %69, %70 : vector<1x32xf32>
    %72 = arith.addf %68, %71 : vector<1x32xf32>
    %73 = vector.extract_strided_slice %65 {offsets = [0, 96], sizes = [1, 32], strides = [1, 1]} : vector<1x128xf32> to vector<1x32xf32>
    %74 = math.tanh %72 : vector<1x32xf32>
    %75 = arith.mulf %73, %74 : vector<1x32xf32>
    %76 = arith.truncf %55 : vector<1x32xf32> to vector<1x32xbf16>
    %cst_24 = arith.constant dense<0.000000e+00> : vector<1x128xf32>
    %77 = tpu.matmul %76, %3, %cst_24 {dimension_numbers = #tpu.dot_dimension_numbers<[1], [0], [0], [1], [0, 0, 1, 1], [], []>} : vector<1x32xbf16>, vector<32x128xbf16>, vector<1x128xf32> -> vector<1x128xf32>
    %78 = arith.addf %6, %77 : vector<1x128xf32>
    %79 = arith.truncf %75 : vector<1x32xf32> to vector<1x32xbf16>
    %cst_25 = arith.constant dense<0.000000e+00> : vector<1x128xf32>
    %80 = tpu.matmul %79, %2, %cst_25 {dimension_numbers = #tpu.dot_dimension_numbers<[1], [0], [0], [1], [0, 0, 1, 1], [], []>} : vector<1x32xbf16>, vector<32x128xbf16>, vector<1x128xf32> -> vector<1x128xf32>
    %81 = arith.addf %78, %80 : vector<1x128xf32>
    %82 = arith.negf %81 : vector<1x128xf32>
    %83 = math.exp %82 : vector<1x128xf32>
    %cst_26 = arith.constant 1.000000e+00 : f32
    %84 = vector.broadcast %cst_26 : f32 to vector<1x128xf32>
    %85 = arith.addf %84, %83 : vector<1x128xf32>
    %86 = arith.divf %84, %85 : vector<1x128xf32>
    %87 = math.tanh %81 : vector<1x128xf32>
    %88 = vector.extract_strided_slice %86 {offsets = [0, 32], sizes = [1, 32], strides = [1, 1]} : vector<1x128xf32> to vector<1x32xf32>
    %89 = arith.mulf %88, %52 : vector<1x32xf32>
    %90 = vector.extract_strided_slice %86 {offsets = [0, 0], sizes = [1, 32], strides = [1, 1]} : vector<1x128xf32> to vector<1x32xf32>
    %91 = vector.extract_strided_slice %87 {offsets = [0, 64], sizes = [1, 32], strides = [1, 1]} : vector<1x128xf32> to vector<1x32xf32>
    %92 = arith.mulf %90, %91 : vector<1x32xf32>
    %93 = arith.addf %89, %92 : vector<1x32xf32>
    %94 = vector.extract_strided_slice %86 {offsets = [0, 96], sizes = [1, 32], strides = [1, 1]} : vector<1x128xf32> to vector<1x32xf32>
    %95 = math.tanh %93 : vector<1x32xf32>
    %96 = arith.mulf %94, %95 : vector<1x32xf32>
    %c1_27 = arith.constant 1 : index
    %c0_28 = arith.constant 0 : index
    %97 = vector.load %arg4[%c1_27, %c0_28] : memref<8x32xf32, #tpu.memory_space<vmem>>, vector<1x32xf32>
    tpu.vector_store %arg4[%c1_27, %c0_28], %96 {strides = array<i32>} : memref<8x32xf32, #tpu.memory_space<vmem>>, vector<1x32xf32>,
    %98 = vector.extract_strided_slice %15 {offsets = [2, 0], sizes = [1, 128], strides = [1, 1]} : vector<8x128xf32> to vector<1x128xf32>
    %99 = arith.truncf %75 : vector<1x32xf32> to vector<1x32xbf16>
    %cst_29 = arith.constant dense<0.000000e+00> : vector<1x128xf32>
    %100 = tpu.matmul %99, %1, %cst_29 {dimension_numbers = #tpu.dot_dimension_numbers<[1], [0], [0], [1], [0, 0, 1, 1], [], []>} : vector<1x32xbf16>, vector<32x128xbf16>, vector<1x128xf32> -> vector<1x128xf32>
    %101 = arith.addf %98, %100 : vector<1x128xf32>
    %102 = arith.negf %101 : vector<1x128xf32>
    %103 = math.exp %102 : vector<1x128xf32>
    %cst_30 = arith.constant 1.000000e+00 : f32
    %104 = vector.broadcast %cst_30 : f32 to vector<1x128xf32>
    %105 = arith.addf %104, %103 : vector<1x128xf32>
    %106 = arith.divf %104, %105 : vector<1x128xf32>
    %107 = math.tanh %101 : vector<1x128xf32>
    %108 = vector.extract_strided_slice %106 {offsets = [0, 32], sizes = [1, 32], strides = [1, 1]} : vector<1x128xf32> to vector<1x32xf32>
    %109 = arith.mulf %108, %72 : vector<1x32xf32>
    %110 = vector.extract_strided_slice %106 {offsets = [0, 0], sizes = [1, 32], strides = [1, 1]} : vector<1x128xf32> to vector<1x32xf32>
    %111 = vector.extract_strided_slice %107 {offsets = [0, 64], sizes = [1, 32], strides = [1, 1]} : vector<1x128xf32> to vector<1x32xf32>
    %112 = arith.mulf %110, %111 : vector<1x32xf32>
    %113 = arith.addf %109, %112 : vector<1x32xf32>
    %114 = vector.extract_strided_slice %106 {offsets = [0, 96], sizes = [1, 32], strides = [1, 1]} : vector<1x128xf32> to vector<1x32xf32>
    %115 = math.tanh %113 : vector<1x32xf32>
    %116 = arith.mulf %114, %115 : vector<1x32xf32>
    %117 = arith.truncf %96 : vector<1x32xf32> to vector<1x32xbf16>
    %cst_31 = arith.constant dense<0.000000e+00> : vector<1x128xf32>
    %118 = tpu.matmul %117, %3, %cst_31 {dimension_numbers = #tpu.dot_dimension_numbers<[1], [0], [0], [1], [0, 0, 1, 1], [], []>} : vector<1x32xbf16>, vector<32x128xbf16>, vector<1x128xf32> -> vector<1x128xf32>
    %119 = arith.addf %6, %118 : vector<1x128xf32>
    %120 = arith.truncf %116 : vector<1x32xf32> to vector<1x32xbf16>
    %cst_32 = arith.constant dense<0.000000e+00> : vector<1x128xf32>
    %121 = tpu.matmul %120, %2, %cst_32 {dimension_numbers = #tpu.dot_dimension_numbers<[1], [0], [0], [1], [0, 0, 1, 1], [], []>} : vector<1x32xbf16>, vector<32x128xbf16>, vector<1x128xf32> -> vector<1x128xf32>
    %122 = arith.addf %119, %121 : vector<1x128xf32>
    %123 = arith.negf %122 : vector<1x128xf32>
    %124 = math.exp %123 : vector<1x128xf32>
    %cst_33 = arith.constant 1.000000e+00 : f32
    %125 = vector.broadcast %cst_33 : f32 to vector<1x128xf32>
    %126 = arith.addf %125, %124 : vector<1x128xf32>
    %127 = arith.divf %125, %126 : vector<1x128xf32>
    %128 = math.tanh %122 : vector<1x128xf32>
    %129 = vector.extract_strided_slice %127 {offsets = [0, 32], sizes = [1, 32], strides = [1, 1]} : vector<1x128xf32> to vector<1x32xf32>
    %130 = arith.mulf %129, %93 : vector<1x32xf32>
    %131 = vector.extract_strided_slice %127 {offsets = [0, 0], sizes = [1, 32], strides = [1, 1]} : vector<1x128xf32> to vector<1x32xf32>
    %132 = vector.extract_strided_slice %128 {offsets = [0, 64], sizes = [1, 32], strides = [1, 1]} : vector<1x128xf32> to vector<1x32xf32>
    %133 = arith.mulf %131, %132 : vector<1x32xf32>
    %134 = arith.addf %130, %133 : vector<1x32xf32>
    %135 = vector.extract_strided_slice %127 {offsets = [0, 96], sizes = [1, 32], strides = [1, 1]} : vector<1x128xf32> to vector<1x32xf32>
    %136 = math.tanh %134 : vector<1x32xf32>
    %137 = arith.mulf %135, %136 : vector<1x32xf32>
    %c2_34 = arith.constant 2 : index
    %c0_35 = arith.constant 0 : index
    %138 = vector.load %arg4[%c2_34, %c0_35] : memref<8x32xf32, #tpu.memory_space<vmem>>, vector<1x32xf32>
    tpu.vector_store %arg4[%c2_34, %c0_35], %137 {strides = array<i32>} : memref<8x32xf32, #tpu.memory_space<vmem>>, vector<1x32xf32>,
    %139 = vector.extract_strided_slice %15 {offsets = [3, 0], sizes = [1, 128], strides = [1, 1]} : vector<8x128xf32> to vector<1x128xf32>
    %140 = arith.truncf %116 : vector<1x32xf32> to vector<1x32xbf16>
    %cst_36 = arith.constant dense<0.000000e+00> : vector<1x128xf32>
    %141 = tpu.matmul %140, %1, %cst_36 {dimension_numbers = #tpu.dot_dimension_numbers<[1], [0], [0], [1], [0, 0, 1, 1], [], []>} : vector<1x32xbf16>, vector<32x128xbf16>, vector<1x128xf32> -> vector<1x128xf32>
    %142 = arith.addf %139, %141 : vector<1x128xf32>
    %143 = arith.negf %142 : vector<1x128xf32>
    %144 = math.exp %143 : vector<1x128xf32>
    %cst_37 = arith.constant 1.000000e+00 : f32
    %145 = vector.broadcast %cst_37 : f32 to vector<1x128xf32>
    %146 = arith.addf %145, %144 : vector<1x128xf32>
    %147 = arith.divf %145, %146 : vector<1x128xf32>
    %148 = math.tanh %142 : vector<1x128xf32>
    %149 = vector.extract_strided_slice %147 {offsets = [0, 32], sizes = [1, 32], strides = [1, 1]} : vector<1x128xf32> to vector<1x32xf32>
    %150 = arith.mulf %149, %113 : vector<1x32xf32>
    %151 = vector.extract_strided_slice %147 {offsets = [0, 0], sizes = [1, 32], strides = [1, 1]} : vector<1x128xf32> to vector<1x32xf32>
    %152 = vector.extract_strided_slice %148 {offsets = [0, 64], sizes = [1, 32], strides = [1, 1]} : vector<1x128xf32> to vector<1x32xf32>
    %153 = arith.mulf %151, %152 : vector<1x32xf32>
    %154 = arith.addf %150, %153 : vector<1x32xf32>
    %155 = vector.extract_strided_slice %147 {offsets = [0, 96], sizes = [1, 32], strides = [1, 1]} : vector<1x128xf32> to vector<1x32xf32>
    %156 = math.tanh %154 : vector<1x32xf32>
    %157 = arith.mulf %155, %156 : vector<1x32xf32>
    %158 = arith.truncf %137 : vector<1x32xf32> to vector<1x32xbf16>
    %cst_38 = arith.constant dense<0.000000e+00> : vector<1x128xf32>
    %159 = tpu.matmul %158, %3, %cst_38 {dimension_numbers = #tpu.dot_dimension_numbers<[1], [0], [0], [1], [0, 0, 1, 1], [], []>} : vector<1x32xbf16>, vector<32x128xbf16>, vector<1x128xf32> -> vector<1x128xf32>
    %160 = arith.addf %6, %159 : vector<1x128xf32>
    %161 = arith.truncf %157 : vector<1x32xf32> to vector<1x32xbf16>
    %cst_39 = arith.constant dense<0.000000e+00> : vector<1x128xf32>
    %162 = tpu.matmul %161, %2, %cst_39 {dimension_numbers = #tpu.dot_dimension_numbers<[1], [0], [0], [1], [0, 0, 1, 1], [], []>} : vector<1x32xbf16>, vector<32x128xbf16>, vector<1x128xf32> -> vector<1x128xf32>
    %163 = arith.addf %160, %162 : vector<1x128xf32>
    %164 = arith.negf %163 : vector<1x128xf32>
    %165 = math.exp %164 : vector<1x128xf32>
    %cst_40 = arith.constant 1.000000e+00 : f32
    %166 = vector.broadcast %cst_40 : f32 to vector<1x128xf32>
    %167 = arith.addf %166, %165 : vector<1x128xf32>
    %168 = arith.divf %166, %167 : vector<1x128xf32>
    %169 = math.tanh %163 : vector<1x128xf32>
    %170 = vector.extract_strided_slice %168 {offsets = [0, 32], sizes = [1, 32], strides = [1, 1]} : vector<1x128xf32> to vector<1x32xf32>
    %171 = arith.mulf %170, %134 : vector<1x32xf32>
    %172 = vector.extract_strided_slice %168 {offsets = [0, 0], sizes = [1, 32], strides = [1, 1]} : vector<1x128xf32> to vector<1x32xf32>
    %173 = vector.extract_strided_slice %169 {offsets = [0, 64], sizes = [1, 32], strides = [1, 1]} : vector<1x128xf32> to vector<1x32xf32>
    %174 = arith.mulf %172, %173 : vector<1x32xf32>
    %175 = arith.addf %171, %174 : vector<1x32xf32>
    %176 = vector.extract_strided_slice %168 {offsets = [0, 96], sizes = [1, 32], strides = [1, 1]} : vector<1x128xf32> to vector<1x32xf32>
    %177 = math.tanh %175 : vector<1x32xf32>
    %178 = arith.mulf %176, %177 : vector<1x32xf32>
    %c3_41 = arith.constant 3 : index
    %c0_42 = arith.constant 0 : index
    %179 = vector.load %arg4[%c3_41, %c0_42] : memref<8x32xf32, #tpu.memory_space<vmem>>, vector<1x32xf32>
    tpu.vector_store %arg4[%c3_41, %c0_42], %178 {strides = array<i32>} : memref<8x32xf32, #tpu.memory_space<vmem>>, vector<1x32xf32>,
    %180 = vector.extract_strided_slice %15 {offsets = [4, 0], sizes = [1, 128], strides = [1, 1]} : vector<8x128xf32> to vector<1x128xf32>
    %181 = arith.truncf %157 : vector<1x32xf32> to vector<1x32xbf16>
    %cst_43 = arith.constant dense<0.000000e+00> : vector<1x128xf32>
    %182 = tpu.matmul %181, %1, %cst_43 {dimension_numbers = #tpu.dot_dimension_numbers<[1], [0], [0], [1], [0, 0, 1, 1], [], []>} : vector<1x32xbf16>, vector<32x128xbf16>, vector<1x128xf32> -> vector<1x128xf32>
    %183 = arith.addf %180, %182 : vector<1x128xf32>
    %184 = arith.negf %183 : vector<1x128xf32>
    %185 = math.exp %184 : vector<1x128xf32>
    %cst_44 = arith.constant 1.000000e+00 : f32
    %186 = vector.broadcast %cst_44 : f32 to vector<1x128xf32>
    %187 = arith.addf %186, %185 : vector<1x128xf32>
    %188 = arith.divf %186, %187 : vector<1x128xf32>
    %189 = math.tanh %183 : vector<1x128xf32>
    %190 = vector.extract_strided_slice %188 {offsets = [0, 32], sizes = [1, 32], strides = [1, 1]} : vector<1x128xf32> to vector<1x32xf32>
    %191 = arith.mulf %190, %154 : vector<1x32xf32>
    %192 = vector.extract_strided_slice %188 {offsets = [0, 0], sizes = [1, 32], strides = [1, 1]} : vector<1x128xf32> to vector<1x32xf32>
    %193 = vector.extract_strided_slice %189 {offsets = [0, 64], sizes = [1, 32], strides = [1, 1]} : vector<1x128xf32> to vector<1x32xf32>
    %194 = arith.mulf %192, %193 : vector<1x32xf32>
    %195 = arith.addf %191, %194 : vector<1x32xf32>
    %196 = vector.extract_strided_slice %188 {offsets = [0, 96], sizes = [1, 32], strides = [1, 1]} : vector<1x128xf32> to vector<1x32xf32>
    %197 = math.tanh %195 : vector<1x32xf32>
    %198 = arith.mulf %196, %197 : vector<1x32xf32>
    %199 = arith.truncf %178 : vector<1x32xf32> to vector<1x32xbf16>
    %cst_45 = arith.constant dense<0.000000e+00> : vector<1x128xf32>
    %200 = tpu.matmul %199, %3, %cst_45 {dimension_numbers = #tpu.dot_dimension_numbers<[1], [0], [0], [1], [0, 0, 1, 1], [], []>} : vector<1x32xbf16>, vector<32x128xbf16>, vector<1x128xf32> -> vector<1x128xf32>
    %201 = arith.addf %6, %200 : vector<1x128xf32>
    %202 = arith.truncf %198 : vector<1x32xf32> to vector<1x32xbf16>
    %cst_46 = arith.constant dense<0.000000e+00> : vector<1x128xf32>
    %203 = tpu.matmul %202, %2, %cst_46 {dimension_numbers = #tpu.dot_dimension_numbers<[1], [0], [0], [1], [0, 0, 1, 1], [], []>} : vector<1x32xbf16>, vector<32x128xbf16>, vector<1x128xf32> -> vector<1x128xf32>
    %204 = arith.addf %201, %203 : vector<1x128xf32>
    %205 = arith.negf %204 : vector<1x128xf32>
    %206 = math.exp %205 : vector<1x128xf32>
    %cst_47 = arith.constant 1.000000e+00 : f32
    %207 = vector.broadcast %cst_47 : f32 to vector<1x128xf32>
    %208 = arith.addf %207, %206 : vector<1x128xf32>
    %209 = arith.divf %207, %208 : vector<1x128xf32>
    %210 = math.tanh %204 : vector<1x128xf32>
    %211 = vector.extract_strided_slice %209 {offsets = [0, 32], sizes = [1, 32], strides = [1, 1]} : vector<1x128xf32> to vector<1x32xf32>
    %212 = arith.mulf %211, %175 : vector<1x32xf32>
    %213 = vector.extract_strided_slice %209 {offsets = [0, 0], sizes = [1, 32], strides = [1, 1]} : vector<1x128xf32> to vector<1x32xf32>
    %214 = vector.extract_strided_slice %210 {offsets = [0, 64], sizes = [1, 32], strides = [1, 1]} : vector<1x128xf32> to vector<1x32xf32>
    %215 = arith.mulf %213, %214 : vector<1x32xf32>
    %216 = arith.addf %212, %215 : vector<1x32xf32>
    %217 = vector.extract_strided_slice %209 {offsets = [0, 96], sizes = [1, 32], strides = [1, 1]} : vector<1x128xf32> to vector<1x32xf32>
    %218 = math.tanh %216 : vector<1x32xf32>
    %219 = arith.mulf %217, %218 : vector<1x32xf32>
    %c4_48 = arith.constant 4 : index
    %c0_49 = arith.constant 0 : index
    %220 = vector.load %arg4[%c4_48, %c0_49] : memref<8x32xf32, #tpu.memory_space<vmem>>, vector<1x32xf32>
    tpu.vector_store %arg4[%c4_48, %c0_49], %219 {strides = array<i32>} : memref<8x32xf32, #tpu.memory_space<vmem>>, vector<1x32xf32>,
    %221 = vector.extract_strided_slice %15 {offsets = [5, 0], sizes = [1, 128], strides = [1, 1]} : vector<8x128xf32> to vector<1x128xf32>
    %222 = arith.truncf %198 : vector<1x32xf32> to vector<1x32xbf16>
    %cst_50 = arith.constant dense<0.000000e+00> : vector<1x128xf32>
    %223 = tpu.matmul %222, %1, %cst_50 {dimension_numbers = #tpu.dot_dimension_numbers<[1], [0], [0], [1], [0, 0, 1, 1], [], []>} : vector<1x32xbf16>, vector<32x128xbf16>, vector<1x128xf32> -> vector<1x128xf32>
    %224 = arith.addf %221, %223 : vector<1x128xf32>
    %225 = arith.negf %224 : vector<1x128xf32>
    %226 = math.exp %225 : vector<1x128xf32>
    %cst_51 = arith.constant 1.000000e+00 : f32
    %227 = vector.broadcast %cst_51 : f32 to vector<1x128xf32>
    %228 = arith.addf %227, %226 : vector<1x128xf32>
    %229 = arith.divf %227, %228 : vector<1x128xf32>
    %230 = math.tanh %224 : vector<1x128xf32>
    %231 = vector.extract_strided_slice %229 {offsets = [0, 32], sizes = [1, 32], strides = [1, 1]} : vector<1x128xf32> to vector<1x32xf32>
    %232 = arith.mulf %231, %195 : vector<1x32xf32>
    %233 = vector.extract_strided_slice %229 {offsets = [0, 0], sizes = [1, 32], strides = [1, 1]} : vector<1x128xf32> to vector<1x32xf32>
    %234 = vector.extract_strided_slice %230 {offsets = [0, 64], sizes = [1, 32], strides = [1, 1]} : vector<1x128xf32> to vector<1x32xf32>
    %235 = arith.mulf %233, %234 : vector<1x32xf32>
    %236 = arith.addf %232, %235 : vector<1x32xf32>
    %237 = vector.extract_strided_slice %229 {offsets = [0, 96], sizes = [1, 32], strides = [1, 1]} : vector<1x128xf32> to vector<1x32xf32>
    %238 = math.tanh %236 : vector<1x32xf32>
    %239 = arith.mulf %237, %238 : vector<1x32xf32>
    %240 = arith.truncf %219 : vector<1x32xf32> to vector<1x32xbf16>
    %cst_52 = arith.constant dense<0.000000e+00> : vector<1x128xf32>
    %241 = tpu.matmul %240, %3, %cst_52 {dimension_numbers = #tpu.dot_dimension_numbers<[1], [0], [0], [1], [0, 0, 1, 1], [], []>} : vector<1x32xbf16>, vector<32x128xbf16>, vector<1x128xf32> -> vector<1x128xf32>
    %242 = arith.addf %6, %241 : vector<1x128xf32>
    %243 = arith.truncf %239 : vector<1x32xf32> to vector<1x32xbf16>
    %cst_53 = arith.constant dense<0.000000e+00> : vector<1x128xf32>
    %244 = tpu.matmul %243, %2, %cst_53 {dimension_numbers = #tpu.dot_dimension_numbers<[1], [0], [0], [1], [0, 0, 1, 1], [], []>} : vector<1x32xbf16>, vector<32x128xbf16>, vector<1x128xf32> -> vector<1x128xf32>
    %245 = arith.addf %242, %244 : vector<1x128xf32>
    %246 = arith.negf %245 : vector<1x128xf32>
    %247 = math.exp %246 : vector<1x128xf32>
    %cst_54 = arith.constant 1.000000e+00 : f32
    %248 = vector.broadcast %cst_54 : f32 to vector<1x128xf32>
    %249 = arith.addf %248, %247 : vector<1x128xf32>
    %250 = arith.divf %248, %249 : vector<1x128xf32>
    %251 = math.tanh %245 : vector<1x128xf32>
    %252 = vector.extract_strided_slice %250 {offsets = [0, 32], sizes = [1, 32], strides = [1, 1]} : vector<1x128xf32> to vector<1x32xf32>
    %253 = arith.mulf %252, %216 : vector<1x32xf32>
    %254 = vector.extract_strided_slice %250 {offsets = [0, 0], sizes = [1, 32], strides = [1, 1]} : vector<1x128xf32> to vector<1x32xf32>
    %255 = vector.extract_strided_slice %251 {offsets = [0, 64], sizes = [1, 32], strides = [1, 1]} : vector<1x128xf32> to vector<1x32xf32>
    %256 = arith.mulf %254, %255 : vector<1x32xf32>
    %257 = arith.addf %253, %256 : vector<1x32xf32>
    %258 = vector.extract_strided_slice %250 {offsets = [0, 96], sizes = [1, 32], strides = [1, 1]} : vector<1x128xf32> to vector<1x32xf32>
    %259 = math.tanh %257 : vector<1x32xf32>
    %260 = arith.mulf %258, %259 : vector<1x32xf32>
    %c5_55 = arith.constant 5 : index
    %c0_56 = arith.constant 0 : index
    %261 = vector.load %arg4[%c5_55, %c0_56] : memref<8x32xf32, #tpu.memory_space<vmem>>, vector<1x32xf32>
    tpu.vector_store %arg4[%c5_55, %c0_56], %260 {strides = array<i32>} : memref<8x32xf32, #tpu.memory_space<vmem>>, vector<1x32xf32>,
    %262 = vector.extract_strided_slice %15 {offsets = [6, 0], sizes = [1, 128], strides = [1, 1]} : vector<8x128xf32> to vector<1x128xf32>
    %263 = arith.truncf %239 : vector<1x32xf32> to vector<1x32xbf16>
    %cst_57 = arith.constant dense<0.000000e+00> : vector<1x128xf32>
    %264 = tpu.matmul %263, %1, %cst_57 {dimension_numbers = #tpu.dot_dimension_numbers<[1], [0], [0], [1], [0, 0, 1, 1], [], []>} : vector<1x32xbf16>, vector<32x128xbf16>, vector<1x128xf32> -> vector<1x128xf32>
    %265 = arith.addf %262, %264 : vector<1x128xf32>
    %266 = arith.negf %265 : vector<1x128xf32>
    %267 = math.exp %266 : vector<1x128xf32>
    %cst_58 = arith.constant 1.000000e+00 : f32
    %268 = vector.broadcast %cst_58 : f32 to vector<1x128xf32>
    %269 = arith.addf %268, %267 : vector<1x128xf32>
    %270 = arith.divf %268, %269 : vector<1x128xf32>
    %271 = math.tanh %265 : vector<1x128xf32>
    %272 = vector.extract_strided_slice %270 {offsets = [0, 32], sizes = [1, 32], strides = [1, 1]} : vector<1x128xf32> to vector<1x32xf32>
    %273 = arith.mulf %272, %236 : vector<1x32xf32>
    %274 = vector.extract_strided_slice %270 {offsets = [0, 0], sizes = [1, 32], strides = [1, 1]} : vector<1x128xf32> to vector<1x32xf32>
    %275 = vector.extract_strided_slice %271 {offsets = [0, 64], sizes = [1, 32], strides = [1, 1]} : vector<1x128xf32> to vector<1x32xf32>
    %276 = arith.mulf %274, %275 : vector<1x32xf32>
    %277 = arith.addf %273, %276 : vector<1x32xf32>
    %278 = vector.extract_strided_slice %270 {offsets = [0, 96], sizes = [1, 32], strides = [1, 1]} : vector<1x128xf32> to vector<1x32xf32>
    %279 = math.tanh %277 : vector<1x32xf32>
    %280 = arith.mulf %278, %279 : vector<1x32xf32>
    %281 = arith.truncf %260 : vector<1x32xf32> to vector<1x32xbf16>
    %cst_59 = arith.constant dense<0.000000e+00> : vector<1x128xf32>
    %282 = tpu.matmul %281, %3, %cst_59 {dimension_numbers = #tpu.dot_dimension_numbers<[1], [0], [0], [1], [0, 0, 1, 1], [], []>} : vector<1x32xbf16>, vector<32x128xbf16>, vector<1x128xf32> -> vector<1x128xf32>
    %283 = arith.addf %6, %282 : vector<1x128xf32>
    %284 = arith.truncf %280 : vector<1x32xf32> to vector<1x32xbf16>
    %cst_60 = arith.constant dense<0.000000e+00> : vector<1x128xf32>
    %285 = tpu.matmul %284, %2, %cst_60 {dimension_numbers = #tpu.dot_dimension_numbers<[1], [0], [0], [1], [0, 0, 1, 1], [], []>} : vector<1x32xbf16>, vector<32x128xbf16>, vector<1x128xf32> -> vector<1x128xf32>
    %286 = arith.addf %283, %285 : vector<1x128xf32>
    %287 = arith.negf %286 : vector<1x128xf32>
    %288 = math.exp %287 : vector<1x128xf32>
    %cst_61 = arith.constant 1.000000e+00 : f32
    %289 = vector.broadcast %cst_61 : f32 to vector<1x128xf32>
    %290 = arith.addf %289, %288 : vector<1x128xf32>
    %291 = arith.divf %289, %290 : vector<1x128xf32>
    %292 = math.tanh %286 : vector<1x128xf32>
    %293 = vector.extract_strided_slice %291 {offsets = [0, 32], sizes = [1, 32], strides = [1, 1]} : vector<1x128xf32> to vector<1x32xf32>
    %294 = arith.mulf %293, %257 : vector<1x32xf32>
    %295 = vector.extract_strided_slice %291 {offsets = [0, 0], sizes = [1, 32], strides = [1, 1]} : vector<1x128xf32> to vector<1x32xf32>
    %296 = vector.extract_strided_slice %292 {offsets = [0, 64], sizes = [1, 32], strides = [1, 1]} : vector<1x128xf32> to vector<1x32xf32>
    %297 = arith.mulf %295, %296 : vector<1x32xf32>
    %298 = arith.addf %294, %297 : vector<1x32xf32>
    %299 = vector.extract_strided_slice %291 {offsets = [0, 96], sizes = [1, 32], strides = [1, 1]} : vector<1x128xf32> to vector<1x32xf32>
    %300 = math.tanh %298 : vector<1x32xf32>
    %301 = arith.mulf %299, %300 : vector<1x32xf32>
    %c6_62 = arith.constant 6 : index
    %c0_63 = arith.constant 0 : index
    %302 = vector.load %arg4[%c6_62, %c0_63] : memref<8x32xf32, #tpu.memory_space<vmem>>, vector<1x32xf32>
    tpu.vector_store %arg4[%c6_62, %c0_63], %301 {strides = array<i32>} : memref<8x32xf32, #tpu.memory_space<vmem>>, vector<1x32xf32>,
    %303 = vector.extract_strided_slice %15 {offsets = [7, 0], sizes = [1, 128], strides = [1, 1]} : vector<8x128xf32> to vector<1x128xf32>
    %304 = arith.truncf %280 : vector<1x32xf32> to vector<1x32xbf16>
    %cst_64 = arith.constant dense<0.000000e+00> : vector<1x128xf32>
    %305 = tpu.matmul %304, %1, %cst_64 {dimension_numbers = #tpu.dot_dimension_numbers<[1], [0], [0], [1], [0, 0, 1, 1], [], []>} : vector<1x32xbf16>, vector<32x128xbf16>, vector<1x128xf32> -> vector<1x128xf32>
    %306 = arith.addf %303, %305 : vector<1x128xf32>
    %307 = arith.negf %306 : vector<1x128xf32>
    %308 = math.exp %307 : vector<1x128xf32>
    %cst_65 = arith.constant 1.000000e+00 : f32
    %309 = vector.broadcast %cst_65 : f32 to vector<1x128xf32>
    %310 = arith.addf %309, %308 : vector<1x128xf32>
    %311 = arith.divf %309, %310 : vector<1x128xf32>
    %312 = math.tanh %306 : vector<1x128xf32>
    %313 = vector.extract_strided_slice %311 {offsets = [0, 32], sizes = [1, 32], strides = [1, 1]} : vector<1x128xf32> to vector<1x32xf32>
    %314 = arith.mulf %313, %277 : vector<1x32xf32>
    %315 = vector.extract_strided_slice %311 {offsets = [0, 0], sizes = [1, 32], strides = [1, 1]} : vector<1x128xf32> to vector<1x32xf32>
    %316 = vector.extract_strided_slice %312 {offsets = [0, 64], sizes = [1, 32], strides = [1, 1]} : vector<1x128xf32> to vector<1x32xf32>
    %317 = arith.mulf %315, %316 : vector<1x32xf32>
    %318 = arith.addf %314, %317 : vector<1x32xf32>
    %319 = vector.extract_strided_slice %311 {offsets = [0, 96], sizes = [1, 32], strides = [1, 1]} : vector<1x128xf32> to vector<1x32xf32>
    %320 = math.tanh %318 : vector<1x32xf32>
    %321 = arith.mulf %319, %320 : vector<1x32xf32>
    %322 = arith.truncf %301 : vector<1x32xf32> to vector<1x32xbf16>
    %cst_66 = arith.constant dense<0.000000e+00> : vector<1x128xf32>
    %323 = tpu.matmul %322, %3, %cst_66 {dimension_numbers = #tpu.dot_dimension_numbers<[1], [0], [0], [1], [0, 0, 1, 1], [], []>} : vector<1x32xbf16>, vector<32x128xbf16>, vector<1x128xf32> -> vector<1x128xf32>
    %324 = arith.addf %6, %323 : vector<1x128xf32>
    %325 = arith.truncf %321 : vector<1x32xf32> to vector<1x32xbf16>
    %cst_67 = arith.constant dense<0.000000e+00> : vector<1x128xf32>
    %326 = tpu.matmul %325, %2, %cst_67 {dimension_numbers = #tpu.dot_dimension_numbers<[1], [0], [0], [1], [0, 0, 1, 1], [], []>} : vector<1x32xbf16>, vector<32x128xbf16>, vector<1x128xf32> -> vector<1x128xf32>
    %327 = arith.addf %324, %326 : vector<1x128xf32>
    %328 = arith.negf %327 : vector<1x128xf32>
    %329 = math.exp %328 : vector<1x128xf32>
    %cst_68 = arith.constant 1.000000e+00 : f32
    %330 = vector.broadcast %cst_68 : f32 to vector<1x128xf32>
    %331 = arith.addf %330, %329 : vector<1x128xf32>
    %332 = arith.divf %330, %331 : vector<1x128xf32>
    %333 = math.tanh %327 : vector<1x128xf32>
    %334 = vector.extract_strided_slice %332 {offsets = [0, 32], sizes = [1, 32], strides = [1, 1]} : vector<1x128xf32> to vector<1x32xf32>
    %335 = arith.mulf %334, %298 : vector<1x32xf32>
    %336 = vector.extract_strided_slice %332 {offsets = [0, 0], sizes = [1, 32], strides = [1, 1]} : vector<1x128xf32> to vector<1x32xf32>
    %337 = vector.extract_strided_slice %333 {offsets = [0, 64], sizes = [1, 32], strides = [1, 1]} : vector<1x128xf32> to vector<1x32xf32>
    %338 = arith.mulf %336, %337 : vector<1x32xf32>
    %339 = arith.addf %335, %338 : vector<1x32xf32>
    %340 = vector.extract_strided_slice %332 {offsets = [0, 96], sizes = [1, 32], strides = [1, 1]} : vector<1x128xf32> to vector<1x32xf32>
    %341 = math.tanh %339 : vector<1x32xf32>
    %342 = arith.mulf %340, %341 : vector<1x32xf32>
    %c7 = arith.constant 7 : index
    %c0_69 = arith.constant 0 : index
    %343 = vector.load %arg4[%c7, %c0_69] : memref<8x32xf32, #tpu.memory_space<vmem>>, vector<1x32xf32>
    tpu.vector_store %arg4[%c7, %c0_69], %342 {strides = array<i32>} : memref<8x32xf32, #tpu.memory_space<vmem>>, vector<1x32xf32>,
    %c0_70 = arith.constant 0 : index
    %c0_71 = arith.constant 0 : index
    %344 = vector.load %arg4[%c0_70, %c0_71] : memref<8x32xf32, #tpu.memory_space<vmem>>, vector<8x32xf32>
    %345 = arith.truncf %344 : vector<8x32xf32> to vector<8x32xbf16>
    %cst_72 = arith.constant dense<0.000000e+00> : vector<8x128xf32>
    %346 = tpu.matmul %345, %4, %cst_72 {dimension_numbers = #tpu.dot_dimension_numbers<[1], [0], [0], [1], [0, 0, 1, 1], [], []>} : vector<8x32xbf16>, vector<32x128xbf16>, vector<8x128xf32> -> vector<8x128xf32>
    %347 = vector.extract_strided_slice %346 {offsets = [0, 0], sizes = [8, 1], strides = [1, 1]} : vector<8x128xf32> to vector<8x1xf32>
    %348 = vector.broadcast %11 : vector<1x1xf32> to vector<8x1xf32>
    %349 = arith.addf %347, %348 : vector<8x1xf32>
    %350 = arith.negf %349 : vector<8x1xf32>
    %351 = math.exp %350 : vector<8x1xf32>
    %cst_73 = arith.constant 1.000000e+00 : f32
    %352 = vector.broadcast %cst_73 : f32 to vector<8x1xf32>
    %353 = arith.addf %352, %351 : vector<8x1xf32>
    %354 = arith.divf %352, %353 : vector<8x1xf32>
    %c0_74 = arith.constant 0 : index
    %c0_75 = arith.constant 0 : index
    %355 = vector.load %arg3[%c0_74, %c0_75] : memref<8x2xf32, #tpu.memory_space<vmem>>, vector<8x1xf32>
    tpu.vector_store %arg3[%c0_74, %c0_75], %354 {strides = array<i32>} : memref<8x2xf32, #tpu.memory_space<vmem>>, vector<8x1xf32>,
    %cst_76 = arith.constant 1.000000e+00 : f32
    %356 = vector.broadcast %cst_76 : f32 to vector<8x1xf32>
    %357 = arith.subf %356, %354 : vector<8x1xf32>
    %c0_77 = arith.constant 0 : index
    %c1_78 = arith.constant 1 : index
    %358 = vector.load %arg3[%c0_77, %c1_78] : memref<8x2xf32, #tpu.memory_space<vmem>>, vector<8x1xf32>
    tpu.vector_store %arg3[%c0_77, %c1_78], %357 {strides = array<i32>} : memref<8x2xf32, #tpu.memory_space<vmem>>, vector<8x1xf32>,
    return
  }
}

</mosaic_0001>

<llo_original>
// kernel: simple_rnn_forward.1
$region0: #{simple_rnn_forward.1}
  #allocation0 [shape = 'u32[]', space=smem, size = 0x4, offset = 0x4, fixed_abs, tag = 'smem constant byte address 0x4 - core index']
  #allocation1 [shape = 'u32[144,128]{1,0:T(1,128)}', space=vmem, size = 0x12000, scoped, tag = 'internal scratch']
  #allocation2 [shape = 'f32[8,32]{1,0:T(8,128)}', space=vmem, size = 0x1000, scoped, tag = 'scratch operand']
  %s0 = inlined_call_operand.vmem [shape: bf16[8,16], index: 0, kind: input, shape index: {}]
  %s1 = inlined_call_operand.hbm [shape: bf16[144,128], index: 1, kind: input, shape index: {}]
  %s2 = inlined_call_operand.vmem [shape: f32[8,128], index: 2, kind: input, shape index: {}]
  %s3 = inlined_call_operand.vmem [shape: f32[8,2], index: 3, kind: output, shape index: {}]
  %s4 = sld [smem:[#allocation0]]
  $region26: #{simple_rnn_forward.1} parent=0
    _
  %s6 = ssub.s32 1, %s4
  %s7 = scalar_select 0, %s6, %s4
  $region1: #{simple_rnn_forward.1} parent=0
    #allocation3 [shape = 'u8[36864]{0}', space=vmem, size = 0x9000, scoped, tag = 'input window, operand 1, single buffered']
    #allocation4 [shape = 's32[1]{0}', space=sflag, size = 0x4, scoped, tag = 'scoped memory for simple_rnn_forward.1']
    %8 = vsyncpa [#allocation4], 0
    // Predicated region
    $region2: #{simple_rnn_forward.1} parent=1 // pred_check
      _
    $region3: #{simple_rnn_forward.1} parent=1 // pred_check_branch
      %10 = sbr.rel (0) target = $region5
    $region4: #{simple_rnn_forward.1} parent=1 // pred_region
      _
    $region5: #{simple_rnn_forward.1} parent=1 // pred_fallthru
      _
    // Predicated region
    $region6: #{simple_rnn_forward.1} parent=1 // pred_check
      _
    $region7: #{simple_rnn_forward.1} parent=1 // pred_check_branch
      %12 = sbr.rel (0) target = $region9
    $region8: #{simple_rnn_forward.1} parent=1 // pred_region
      %s14 = ssub.s32 1152, 1152
      %15 = vsyncadd [#allocation4], %s14
      %s16 = sshll.u32 [#allocation3], 4
      %s17 = int_to_ptr.vmem [resolvable:$true] %s16
      %22 = dma.hbm_to_vmem [thread:$0]  %s1, 1152, %s17, [#allocation4], 64, 64, 4
    $region9: #{simple_rnn_forward.1} parent=1 // pred_fallthru
      _
    // Predicated region
    $region10: #{simple_rnn_forward.1} parent=1 // pred_check
      _
    $region11: #{simple_rnn_forward.1} parent=1 // pred_check_branch
      %24 = sbr.rel (0) target = $region13
    $region12: #{simple_rnn_forward.1} parent=1 // pred_region
      _
    $region13: #{simple_rnn_forward.1} parent=1 // pred_fallthru
      _
    // Predicated region
    $region14: #{simple_rnn_forward.1} parent=1 // pred_check
      _
    $region15: #{simple_rnn_forward.1} parent=1 // pred_check_branch
      %26 = sbr.rel (0) target = $region17
    $region16: #{simple_rnn_forward.1} parent=1 // pred_region
      %27 = dma.done [#allocation4], 1152
    $region17: #{simple_rnn_forward.1} parent=1 // pred_fallthru
      _
    %v29 = vld [vmem:[#allocation3] sm:$0xf]
    %v30 = vld [vmem:[#allocation3 + $0x4] sm:$0xf]
    %v31 = vld [vmem:[#allocation3 + $0x8] sm:$0xf]
    %v32 = vld [vmem:[#allocation3 + $0xc] sm:$0xf]
    %v33 = vld [vmem:[#allocation3 + $0x10] sm:$0xf]
    %v34 = vld [vmem:[#allocation3 + $0x14] sm:$0xf]
    %v35 = vld [vmem:[#allocation3 + $0x18] sm:$0xf]
    %v36 = vld [vmem:[#allocation3 + $0x1c] sm:$0xf]
    %v37 = vld [vmem:[#allocation3 + $0x20] sm:$0xf]
    %v38 = vld [vmem:[#allocation3 + $0x24] sm:$0xf]
    %v39 = vld [vmem:[#allocation3 + $0x28] sm:$0xf]
    %v40 = vld [vmem:[#allocation3 + $0x2c] sm:$0xf]
    %v41 = vld [vmem:[#allocation3 + $0x30] sm:$0xf]
    %v42 = vld [vmem:[#allocation3 + $0x34] sm:$0xf]
    %v43 = vld [vmem:[#allocation3 + $0x38] sm:$0xf]
    %v44 = vld [vmem:[#allocation3 + $0x3c] sm:$0xf]
    %v45 = vld [vmem:[#allocation3 + $0x40] sm:$0xf]
    %v46 = vld [vmem:[#allocation3 + $0x44] sm:$0xf]
    %v47 = vld [vmem:[%s2] sm:$0x1]
    %v48 = vld [vmem:[%s2 + $0x1] sm:$0x1]
    %v49 = vld [vmem:[%s2 + $0x2] sm:$0x1]
    %v50 = vld [vmem:[%s2 + $0x3] sm:$0x1]
    %v51 = vld [vmem:[%s2 + $0x4] sm:$0x1]
    %v52 = vld [vmem:[%s2 + $0x5] sm:$0x1]
    %v53 = vld [vmem:[%s2 + $0x6] sm:$0x1]
    %v54 = vld [vmem:[%s0] sm:$0xf]
    %v55 = vlaneseq
    %v56 = vshrl.u32 %v55, 7
    %v57 = vsub.s32 0, %v56
    %v58 = vrot.slane %v47, %v57
    %v61 = vunpack.c.l.b16 %v29
    %v62 = vunpack.c.l.b16 %v30
    %v63 = vpack.c.b16 %v62, %v61
    %vm65 = vcmask 130048
    %v67 = vsel %vm65, %v54, 0
    %69 = vmatprep.subr.bf16.mxu0 0
    %70 = vmatpush1.bf16.msra.mxu0 %v63
    %71 = vmatprep.subr.bf16.mxu0 0
    %72 = vmatpush1.bf16.msra.mxu0 0
    %73 = vmatprep.subr.bf16.mxu0 0
    %74 = vmatpush1.bf16.msra.mxu0 0
    %75 = vmatprep.subr.bf16.mxu0 0
    %76 = vmatpush1.bf16.msra.mxu0 0
    %77 = vmatprep.subr.bf16.mxu0 0
    %78 = vmatpush1.bf16.msra.mxu0 0
    %79 = vmatprep.subr.bf16.mxu0 0
    %80 = vmatpush1.bf16.msra.mxu0 0
    %81 = vmatprep.subr.bf16.mxu0 0
    %82 = vmatpush1.bf16.msra.mxu0 0
    %83 = vmatprep.subr.bf16.mxu0 0
    %84 = vmatpush1.bf16.msra.mxu0 0
    %85 = vmatprep.subr.bf16.mxu0 0
    %86 = vmatpush1.bf16.msra.mxu0 0
    %87 = vmatprep.subr.bf16.mxu0 0
    %88 = vmatpush1.bf16.msra.mxu0 0
    %89 = vmatprep.subr.bf16.mxu0 0
    %90 = vmatpush1.bf16.msra.mxu0 0
    %91 = vmatprep.subr.bf16.mxu0 0
    %92 = vmatpush1.bf16.msra.mxu0 0
    %93 = vmatprep.subr.bf16.mxu0 0
    %94 = vmatpush1.bf16.msra.mxu0 0
    %95 = vmatprep.subr.bf16.mxu0 0
    %96 = vmatpush1.bf16.msra.mxu0 0
    %97 = vmatprep.subr.bf16.mxu0 0
    %98 = vmatpush1.bf16.msra.mxu0 0
    %99 = vmatprep.subr.bf16.mxu0 0
    %100 = vmatpush1.bf16.msra.mxu0 0
    %101 = vmatprep.mubr.bf16.mxu0 0
    %102 = vmatmul.mubr.bf16.gmra.mrb[0].mxu0 %v67
    %v103 = vpop.f32.mrb[0].mxu0
    %v104 = vadd.f32 %v58, %v103
    %v105 = vpop.f32.mrb[0].mxu0
    %v106 = vpop.f32.mrb[0].mxu0
    %v107 = vpop.f32.mrb[0].mxu0
    %108 = vdwg.mxu0
    %v109 = vpack.c.bf16 %v49, %v49
    %v114 = vunpack.c.l.b16 %v31
    %v115 = vunpack.c.l.b16 %v32
    %v116 = vunpack.c.l.b16 %v33
    %v117 = vunpack.c.l.b16 %v34
    %v118 = vpack.c.b16 %v115, %v114
    %v119 = vpack.c.b16 %v117, %v116
    %vm122 = vcmask 261120
    %v124 = vsel %vm122, %v109, 0
    %126 = vmatprep.subr.bf16.mxu0 0
    %127 = vmatpush1.bf16.msra.mxu0 %v118
    %128 = vmatprep.subr.bf16.mxu0 0
    %129 = vmatpush1.bf16.msra.mxu0 %v119
    %130 = vmatprep.subr.bf16.mxu0 0
    %131 = vmatpush1.bf16.msra.mxu0 0
    %132 = vmatprep.subr.bf16.mxu0 0
    %133 = vmatpush1.bf16.msra.mxu0 0
    %134 = vmatprep.subr.bf16.mxu0 0
    %135 = vmatpush1.bf16.msra.mxu0 0
    %136 = vmatprep.subr.bf16.mxu0 0
    %137 = vmatpush1.bf16.msra.mxu0 0
    %138 = vmatprep.subr.bf16.mxu0 0
    %139 = vmatpush1.bf16.msra.mxu0 0
    %140 = vmatprep.subr.bf16.mxu0 0
    %141 = vmatpush1.bf16.msra.mxu0 0
    %142 = vmatprep.subr.bf16.mxu0 0
    %143 = vmatpush1.bf16.msra.mxu0 0
    %144 = vmatprep.subr.bf16.mxu0 0
    %145 = vmatpush1.bf16.msra.mxu0 0
    %146 = vmatprep.subr.bf16.mxu0 0
    %147 = vmatpush1.bf16.msra.mxu0 0
    %148 = vmatprep.subr.bf16.mxu0 0
    %149 = vmatpush1.bf16.msra.mxu0 0
    %150 = vmatprep.subr.bf16.mxu0 0
    %151 = vmatpush1.bf16.msra.mxu0 0
    %152 = vmatprep.subr.bf16.mxu0 0
    %153 = vmatpush1.bf16.msra.mxu0 0
    %154 = vmatprep.subr.bf16.mxu0 0
    %155 = vmatpush1.bf16.msra.mxu0 0
    %156 = vmatprep.subr.bf16.mxu0 0
    %157 = vmatpush1.bf16.msra.mxu0 0
    %158 = vmatprep.mubr.bf16.mxu0 0
    %159 = vmatmul.mubr.bf16.gmra.mrb[0].mxu0 %v124
    %v160 = vpop.f32.mrb[0].mxu0
    %v161 = vadd.f32 0.0, %v160
    %v162 = vpop.f32.mrb[0].mxu0
    %v163 = vpop.f32.mrb[0].mxu0
    %v164 = vpop.f32.mrb[0].mxu0
    %165 = vdwg.mxu0
    %v166 = vadd.f32 %v104, %v161
    %v167 = vxor.u32 %v166, 2147483648
    %v168 = vmul.f32 %v167, 1.442695
    %v169 = vpow.pop %v168
    %v170 = vadd.f32 %v169, 1.0
    %v171 = vrcp.pop %v170
    %v172 = vmul.f32 1.0, %v171
    %v173 = vtanh.pop %v166
    %175 = vrot.lane.b32.xlu0 %v51, 32
    %v176 = vpop.permute.xlu0 %175
    %v178 = vmul.f32 %v172, %v176
    %180 = vrot.lane.b32.xlu0 %v173, 64
    %v181 = vpop.permute.xlu0 %180
    %v183 = vmul.f32 %v172, %v181
    %185 = vrot.lane.b32.xlu0 %v183, 32
    %v186 = vpop.permute.xlu0 %185
    %v188 = vadd.f32 %v178, %v186
    %v189 = vtanh.pop %v188
    %191 = vrot.lane.b32.xlu0 %v189, 64
    %v192 = vpop.permute.xlu0 %191
    %v194 = vmul.f32 %v172, %v192
    %v195 = vpack.c.bf16 %v50, %v50
    %v200 = vunpack.c.l.b16 %v39
    %v201 = vunpack.c.l.b16 %v40
    %v202 = vunpack.c.l.b16 %v41
    %v203 = vunpack.c.l.b16 %v42
    %v204 = vpack.c.b16 %v201, %v200
    %v205 = vpack.c.b16 %v203, %v202
    %v209 = vsel %vm122, %v195, 0
    %211 = vmatprep.subr.bf16.mxu0 0
    %212 = vmatpush1.bf16.msra.mxu0 %v204
    %213 = vmatprep.subr.bf16.mxu0 0
    %214 = vmatpush1.bf16.msra.mxu0 %v205
    %215 = vmatprep.subr.bf16.mxu0 0
    %216 = vmatpush1.bf16.msra.mxu0 0
    %217 = vmatprep.subr.bf16.mxu0 0
    %218 = vmatpush1.bf16.msra.mxu0 0
    %219 = vmatprep.subr.bf16.mxu0 0
    %220 = vmatpush1.bf16.msra.mxu0 0
    %221 = vmatprep.subr.bf16.mxu0 0
    %222 = vmatpush1.bf16.msra.mxu0 0
    %223 = vmatprep.subr.bf16.mxu0 0
    %224 = vmatpush1.bf16.msra.mxu0 0
    %225 = vmatprep.subr.bf16.mxu0 0
    %226 = vmatpush1.bf16.msra.mxu0 0
    %227 = vmatprep.subr.bf16.mxu0 0
    %228 = vmatpush1.bf16.msra.mxu0 0
    %229 = vmatprep.subr.bf16.mxu0 0
    %230 = vmatpush1.bf16.msra.mxu0 0
    %231 = vmatprep.subr.bf16.mxu0 0
    %232 = vmatpush1.bf16.msra.mxu0 0
    %233 = vmatprep.subr.bf16.mxu0 0
    %234 = vmatpush1.bf16.msra.mxu0 0
    %235 = vmatprep.subr.bf16.mxu0 0
    %236 = vmatpush1.bf16.msra.mxu0 0
    %237 = vmatprep.subr.bf16.mxu0 0
    %238 = vmatpush1.bf16.msra.mxu0 0
    %239 = vmatprep.subr.bf16.mxu0 0
    %240 = vmatpush1.bf16.msra.mxu0 0
    %241 = vmatprep.subr.bf16.mxu0 0
    %242 = vmatpush1.bf16.msra.mxu0 0
    %243 = vmatprep.mubr.bf16.mxu0 0
    %244 = vmatmul.mubr.bf16.gmra.mrb[0].mxu0 %v209
    %v245 = vpop.f32.mrb[0].mxu0
    %v246 = vadd.f32 0.0, %v245
    %v247 = vpop.f32.mrb[0].mxu0
    %v248 = vpop.f32.mrb[0].mxu0
    %v249 = vpop.f32.mrb[0].mxu0
    %250 = vdwg.mxu0
    %v251 = vadd.f32 %v48, %v246
    %v252 = vpack.c.bf16 %v194, %v194
    %254 = vrot.lane.b32.xlu0 %v252, 32
    %v255 = vpop.permute.xlu0 %254
    %v260 = vunpack.c.l.b16 %v35
    %v261 = vunpack.c.l.b16 %v36
    %v262 = vunpack.c.l.b16 %v37
    %v263 = vunpack.c.l.b16 %v38
    %v264 = vpack.c.b16 %v261, %v260
    %v265 = vpack.c.b16 %v263, %v262
    %v269 = vsel %vm122, %v255, 0
    %271 = vmatprep.subr.bf16.mxu0 0
    %272 = vmatpush1.bf16.msra.mxu0 %v264
    %273 = vmatprep.subr.bf16.mxu0 0
    %274 = vmatpush1.bf16.msra.mxu0 %v265
    %275 = vmatprep.subr.bf16.mxu0 0
    %276 = vmatpush1.bf16.msra.mxu0 0
    %277 = vmatprep.subr.bf16.mxu0 0
    %278 = vmatpush1.bf16.msra.mxu0 0
    %279 = vmatprep.subr.bf16.mxu0 0
    %280 = vmatpush1.bf16.msra.mxu0 0
    %281 = vmatprep.subr.bf16.mxu0 0
    %282 = vmatpush1.bf16.msra.mxu0 0
    %283 = vmatprep.subr.bf16.mxu0 0
    %284 = vmatpush1.bf16.msra.mxu0 0
    %285 = vmatprep.subr.bf16.mxu0 0
    %286 = vmatpush1.bf16.msra.mxu0 0
    %287 = vmatprep.subr.bf16.mxu0 0
    %288 = vmatpush1.bf16.msra.mxu0 0
    %289 = vmatprep.subr.bf16.mxu0 0
    %290 = vmatpush1.bf16.msra.mxu0 0
    %291 = vmatprep.subr.bf16.mxu0 0
    %292 = vmatpush1.bf16.msra.mxu0 0
    %293 = vmatprep.subr.bf16.mxu0 0
    %294 = vmatpush1.bf16.msra.mxu0 0
    %295 = vmatprep.subr.bf16.mxu0 0
    %296 = vmatpush1.bf16.msra.mxu0 0
    %297 = vmatprep.subr.bf16.mxu0 0
    %298 = vmatpush1.bf16.msra.mxu0 0
    %299 = vmatprep.subr.bf16.mxu0 0
    %300 = vmatpush1.bf16.msra.mxu0 0
    %301 = vmatprep.subr.bf16.mxu0 0
    %302 = vmatpush1.bf16.msra.mxu0 0
    %303 = vmatprep.mubr.bf16.mxu0 0
    %304 = vmatmul.mubr.bf16.gmra.mrb[0].mxu0 %v269
    %v305 = vpop.f32.mrb[0].mxu0
    %v306 = vadd.f32 0.0, %v305
    %v307 = vpop.f32.mrb[0].mxu0
    %v308 = vpop.f32.mrb[0].mxu0
    %v309 = vpop.f32.mrb[0].mxu0
    %310 = vdwg.mxu0
    %v311 = vadd.f32 %v251, %v306
    %v312 = vxor.u32 %v311, 2147483648
    %v313 = vmul.f32 %v312, 1.442695
    %v314 = vpow.pop %v313
    %v315 = vadd.f32 %v314, 1.0
    %v316 = vrcp.pop %v315
    %v317 = vmul.f32 1.0, %v316
    %v318 = vtanh.pop %v311
    %320 = vrot.lane.b32.xlu0 %v52, 32
    %v321 = vpop.permute.xlu0 %320
    %v323 = vmul.f32 %v317, %v321
    %325 = vrot.lane.b32.xlu0 %v318, 64
    %v326 = vpop.permute.xlu0 %325
    %v328 = vmul.f32 %v317, %v326
    %330 = vrot.lane.b32.xlu0 %v328, 32
    %v331 = vpop.permute.xlu0 %330
    %v333 = vadd.f32 %v323, %v331
    %v334 = vtanh.pop %v333
    %336 = vrot.lane.b32.xlu0 %v334, 64
    %v337 = vpop.permute.xlu0 %336
    %v339 = vmul.f32 %v317, %v337
    %341 = vrot.lane.b32.xlu0 %v339, 32
    %v342 = vpop.permute.xlu0 %341
    %vm344 = vcmask 253952
    %345 = vst.msk [vmem:[#allocation2] sm:$0x1] %vm344, %v342
    %346 = vmatprep.subr.bf16.mxu0 0
    %347 = vmatpush1.bf16.msra.mxu0 %v118
    %348 = vmatprep.subr.bf16.mxu0 0
    %349 = vmatpush1.bf16.msra.mxu0 %v119
    %350 = vmatprep.subr.bf16.mxu0 0
    %351 = vmatpush1.bf16.msra.mxu0 0
    %352 = vmatprep.subr.bf16.mxu0 0
    %353 = vmatpush1.bf16.msra.mxu0 0
    %354 = vmatprep.subr.bf16.mxu0 0
    %355 = vmatpush1.bf16.msra.mxu0 0
    %356 = vmatprep.subr.bf16.mxu0 0
    %357 = vmatpush1.bf16.msra.mxu0 0
    %358 = vmatprep.subr.bf16.mxu0 0
    %359 = vmatpush1.bf16.msra.mxu0 0
    %360 = vmatprep.subr.bf16.mxu0 0
    %361 = vmatpush1.bf16.msra.mxu0 0
    %362 = vmatprep.subr.bf16.mxu0 0
    %363 = vmatpush1.bf16.msra.mxu0 0
    %364 = vmatprep.subr.bf16.mxu0 0
    %365 = vmatpush1.bf16.msra.mxu0 0
    %366 = vmatprep.subr.bf16.mxu0 0
    %367 = vmatpush1.bf16.msra.mxu0 0
    %368 = vmatprep.subr.bf16.mxu0 0
    %369 = vmatpush1.bf16.msra.mxu0 0
    %370 = vmatprep.subr.bf16.mxu0 0
    %371 = vmatpush1.bf16.msra.mxu0 0
    %372 = vmatprep.subr.bf16.mxu0 0
    %373 = vmatpush1.bf16.msra.mxu0 0
    %374 = vmatprep.subr.bf16.mxu0 0
    %375 = vmatpush1.bf16.msra.mxu0 0
    %376 = vmatprep.subr.bf16.mxu0 0
    %377 = vmatpush1.bf16.msra.mxu0 0
    %378 = vmatprep.mubr.bf16.mxu0 0
    %379 = vmatmul.mubr.bf16.gmra.mrb[0].mxu0 %v269
    %v380 = vpop.f32.mrb[0].mxu0
    %v381 = vadd.f32 0.0, %v380
    %v382 = vpop.f32.mrb[0].mxu0
    %v383 = vpop.f32.mrb[0].mxu0
    %v384 = vpop.f32.mrb[0].mxu0
    %385 = vdwg.mxu0
    %v387 = vrot.slane %v381, 7
    %v389 = vadd.f32 %v104, %v387
    %v390 = vxor.u32 %v389, 2147483648
    %v391 = vmul.f32 %v390, 1.442695
    %v392 = vpow.pop %v391
    %v393 = vadd.f32 %v392, 1.0
    %v394 = vrcp.pop %v393
    %v395 = vmul.f32 1.0, %v394
    %v396 = vtanh.pop %v389
    %v398 = vrot.slane %v188, 7
    %v400 = vmul.f32 %v395, %v398
    %402 = vrot.lane.b32.xlu0 %v396, 64
    %v403 = vpop.permute.xlu0 %402
    %v405 = vmul.f32 %v395, %v403
    %407 = vrot.lane.b32.xlu0 %v405, 32
    %v408 = vpop.permute.xlu0 %407
    %v410 = vadd.f32 %v400, %v408
    %v411 = vtanh.pop %v410
    %413 = vrot.lane.b32.xlu0 %v411, 64
    %v414 = vpop.permute.xlu0 %413
    %v416 = vmul.f32 %v395, %v414
    %v417 = vpack.c.bf16 %v339, %v339
    %419 = vrot.lane.b32.xlu0 %v417, 32
    %v420 = vpop.permute.xlu0 %419
    %v422 = vsel %vm122, %v420, 0
    %424 = vmatprep.subr.bf16.mxu0 0
    %425 = vmatpush1.bf16.msra.mxu0 %v204
    %426 = vmatprep.subr.bf16.mxu0 0
    %427 = vmatpush1.bf16.msra.mxu0 %v205
    %428 = vmatprep.subr.bf16.mxu0 0
    %429 = vmatpush1.bf16.msra.mxu0 0
    %430 = vmatprep.subr.bf16.mxu0 0
    %431 = vmatpush1.bf16.msra.mxu0 0
    %432 = vmatprep.subr.bf16.mxu0 0
    %433 = vmatpush1.bf16.msra.mxu0 0
    %434 = vmatprep.subr.bf16.mxu0 0
    %435 = vmatpush1.bf16.msra.mxu0 0
    %436 = vmatprep.subr.bf16.mxu0 0
    %437 = vmatpush1.bf16.msra.mxu0 0
    %438 = vmatprep.subr.bf16.mxu0 0
    %439 = vmatpush1.bf16.msra.mxu0 0
    %440 = vmatprep.subr.bf16.mxu0 0
    %441 = vmatpush1.bf16.msra.mxu0 0
    %442 = vmatprep.subr.bf16.mxu0 0
    %443 = vmatpush1.bf16.msra.mxu0 0
    %444 = vmatprep.subr.bf16.mxu0 0
    %445 = vmatpush1.bf16.msra.mxu0 0
    %446 = vmatprep.subr.bf16.mxu0 0
    %447 = vmatpush1.bf16.msra.mxu0 0
    %448 = vmatprep.subr.bf16.mxu0 0
    %449 = vmatpush1.bf16.msra.mxu0 0
    %450 = vmatprep.subr.bf16.mxu0 0
    %451 = vmatpush1.bf16.msra.mxu0 0
    %452 = vmatprep.subr.bf16.mxu0 0
    %453 = vmatpush1.bf16.msra.mxu0 0
    %454 = vmatprep.subr.bf16.mxu0 0
    %455 = vmatpush1.bf16.msra.mxu0 0
    %456 = vmatprep.mubr.bf16.mxu0 0
    %457 = vmatmul.mubr.bf16.gmra.mrb[0].mxu0 %v422
    %v458 = vpop.f32.mrb[0].mxu0
    %v459 = vadd.f32 0.0, %v458
    %v460 = vpop.f32.mrb[0].mxu0
    %v461 = vpop.f32.mrb[0].mxu0
    %v462 = vpop.f32.mrb[0].mxu0
    %463 = vdwg.mxu0
    %v464 = vadd.f32 %v48, %v459
    %v465 = vpack.c.bf16 %v416, %v416
    %v467 = vshrl.u32 %v465, 16
    %469 = vrot.lane.b32.xlu0 %v467, 32
    %v470 = vpop.permute.xlu0 %469
    %v472 = vsel %vm122, %v470, 0
    %474 = vmatprep.subr.bf16.mxu0 0
    %475 = vmatpush1.bf16.msra.mxu0 %v264
    %476 = vmatprep.subr.bf16.mxu0 0
    %477 = vmatpush1.bf16.msra.mxu0 %v265
    %478 = vmatprep.subr.bf16.mxu0 0
    %479 = vmatpush1.bf16.msra.mxu0 0
    %480 = vmatprep.subr.bf16.mxu0 0
    %481 = vmatpush1.bf16.msra.mxu0 0
    %482 = vmatprep.subr.bf16.mxu0 0
    %483 = vmatpush1.bf16.msra.mxu0 0
    %484 = vmatprep.subr.bf16.mxu0 0
    %485 = vmatpush1.bf16.msra.mxu0 0
    %486 = vmatprep.subr.bf16.mxu0 0
    %487 = vmatpush1.bf16.msra.mxu0 0
    %488 = vmatprep.subr.bf16.mxu0 0
    %489 = vmatpush1.bf16.msra.mxu0 0
    %490 = vmatprep.subr.bf16.mxu0 0
    %491 = vmatpush1.bf16.msra.mxu0 0
    %492 = vmatprep.subr.bf16.mxu0 0
    %493 = vmatpush1.bf16.msra.mxu0 0
    %494 = vmatprep.subr.bf16.mxu0 0
    %495 = vmatpush1.bf16.msra.mxu0 0
    %496 = vmatprep.subr.bf16.mxu0 0
    %497 = vmatpush1.bf16.msra.mxu0 0
    %498 = vmatprep.subr.bf16.mxu0 0
    %499 = vmatpush1.bf16.msra.mxu0 0
    %500 = vmatprep.subr.bf16.mxu0 0
    %501 = vmatpush1.bf16.msra.mxu0 0
    %502 = vmatprep.subr.bf16.mxu0 0
    %503 = vmatpush1.bf16.msra.mxu0 0
    %504 = vmatprep.subr.bf16.mxu0 0
    %505 = vmatpush1.bf16.msra.mxu0 0
    %506 = vmatprep.mubr.bf16.mxu0 0
    %507 = vmatmul.mubr.bf16.gmra.mrb[0].mxu0 %v472
    %v508 = vpop.f32.mrb[0].mxu0
    %v509 = vadd.f32 0.0, %v508
    %v510 = vpop.f32.mrb[0].mxu0
    %v511 = vpop.f32.mrb[0].mxu0
    %v512 = vpop.f32.mrb[0].mxu0
    %513 = vdwg.mxu0
    %v514 = vadd.f32 %v464, %v509
    %v515 = vxor.u32 %v514, 2147483648
    %v516 = vmul.f32 %v515, 1.442695
    %v517 = vpow.pop %v516
    %v518 = vadd.f32 %v517, 1.0
    %v519 = vrcp.pop %v518
    %v520 = vmul.f32 1.0, %v519
    %v521 = vtanh.pop %v514
    %v522 = vmul.f32 %v520, %v333
    %524 = vrot.lane.b32.xlu0 %v521, 64
    %v525 = vpop.permute.xlu0 %524
    %v527 = vmul.f32 %v520, %v525
    %529 = vrot.lane.b32.xlu0 %v527, 32
    %v530 = vpop.permute.xlu0 %529
    %v532 = vadd.f32 %v522, %v530
    %v533 = vtanh.pop %v532
    %535 = vrot.lane.b32.xlu0 %v533, 64
    %v536 = vpop.permute.xlu0 %535
    %v538 = vmul.f32 %v520, %v536
    %540 = vrot.lane.b32.xlu0 %v538, 32
    %v541 = vpop.permute.xlu0 %540
    %543 = vst.msk [vmem:[#allocation2 + $0x1] sm:$0x1] %vm344, %v541
    %544 = vmatprep.subr.bf16.mxu0 0
    %545 = vmatpush1.bf16.msra.mxu0 %v118
    %546 = vmatprep.subr.bf16.mxu0 0
    %547 = vmatpush1.bf16.msra.mxu0 %v119
    %548 = vmatprep.subr.bf16.mxu0 0
    %549 = vmatpush1.bf16.msra.mxu0 0
    %550 = vmatprep.subr.bf16.mxu0 0
    %551 = vmatpush1.bf16.msra.mxu0 0
    %552 = vmatprep.subr.bf16.mxu0 0
    %553 = vmatpush1.bf16.msra.mxu0 0
    %554 = vmatprep.subr.bf16.mxu0 0
    %555 = vmatpush1.bf16.msra.mxu0 0
    %556 = vmatprep.subr.bf16.mxu0 0
    %557 = vmatpush1.bf16.msra.mxu0 0
    %558 = vmatprep.subr.bf16.mxu0 0
    %559 = vmatpush1.bf16.msra.mxu0 0
    %560 = vmatprep.subr.bf16.mxu0 0
    %561 = vmatpush1.bf16.msra.mxu0 0
    %562 = vmatprep.subr.bf16.mxu0 0
    %563 = vmatpush1.bf16.msra.mxu0 0
    %564 = vmatprep.subr.bf16.mxu0 0
    %565 = vmatpush1.bf16.msra.mxu0 0
    %566 = vmatprep.subr.bf16.mxu0 0
    %567 = vmatpush1.bf16.msra.mxu0 0
    %568 = vmatprep.subr.bf16.mxu0 0
    %569 = vmatpush1.bf16.msra.mxu0 0
    %570 = vmatprep.subr.bf16.mxu0 0
    %571 = vmatpush1.bf16.msra.mxu0 0
    %572 = vmatprep.subr.bf16.mxu0 0
    %573 = vmatpush1.bf16.msra.mxu0 0
    %574 = vmatprep.subr.bf16.mxu0 0
    %575 = vmatpush1.bf16.msra.mxu0 0
    %576 = vmatprep.mubr.bf16.mxu0 0
    %577 = vmatmul.mubr.bf16.gmra.mrb[0].mxu0 %v472
    %v578 = vpop.f32.mrb[0].mxu0
    %v579 = vadd.f32 0.0, %v578
    %v580 = vpop.f32.mrb[0].mxu0
    %v581 = vpop.f32.mrb[0].mxu0
    %v582 = vpop.f32.mrb[0].mxu0
    %583 = vdwg.mxu0
    %v585 = vrot.slane %v579, 6
    %v587 = vadd.f32 %v104, %v585
    %v588 = vxor.u32 %v587, 2147483648
    %v589 = vmul.f32 %v588, 1.442695
    %v590 = vpow.pop %v589
    %v591 = vadd.f32 %v590, 1.0
    %v592 = vrcp.pop %v591
    %v593 = vmul.f32 1.0, %v592
    %v594 = vtanh.pop %v587
    %v596 = vrot.slane %v410, 7
    %v598 = vmul.f32 %v593, %v596
    %600 = vrot.lane.b32.xlu0 %v594, 64
    %v601 = vpop.permute.xlu0 %600
    %v603 = vmul.f32 %v593, %v601
    %605 = vrot.lane.b32.xlu0 %v603, 32
    %v606 = vpop.permute.xlu0 %605
    %v608 = vadd.f32 %v598, %v606
    %v609 = vtanh.pop %v608
    %611 = vrot.lane.b32.xlu0 %v609, 64
    %v612 = vpop.permute.xlu0 %611
    %v614 = vmul.f32 %v593, %v612
    %v615 = vpack.c.bf16 %v538, %v538
    %617 = vrot.lane.b32.xlu0 %v615, 32
    %v618 = vpop.permute.xlu0 %617
    %v620 = vsel %vm122, %v618, 0
    %622 = vmatprep.subr.bf16.mxu0 0
    %623 = vmatpush1.bf16.msra.mxu0 %v204
    %624 = vmatprep.subr.bf16.mxu0 0
    %625 = vmatpush1.bf16.msra.mxu0 %v205
    %626 = vmatprep.subr.bf16.mxu0 0
    %627 = vmatpush1.bf16.msra.mxu0 0
    %628 = vmatprep.subr.bf16.mxu0 0
    %629 = vmatpush1.bf16.msra.mxu0 0
    %630 = vmatprep.subr.bf16.mxu0 0
    %631 = vmatpush1.bf16.msra.mxu0 0
    %632 = vmatprep.subr.bf16.mxu0 0
    %633 = vmatpush1.bf16.msra.mxu0 0
    %634 = vmatprep.subr.bf16.mxu0 0
    %635 = vmatpush1.bf16.msra.mxu0 0
    %636 = vmatprep.subr.bf16.mxu0 0
    %637 = vmatpush1.bf16.msra.mxu0 0
    %638 = vmatprep.subr.bf16.mxu0 0
    %639 = vmatpush1.bf16.msra.mxu0 0
    %640 = vmatprep.subr.bf16.mxu0 0
    %641 = vmatpush1.bf16.msra.mxu0 0
    %642 = vmatprep.subr.bf16.mxu0 0
    %643 = vmatpush1.bf16.msra.mxu0 0
    %644 = vmatprep.subr.bf16.mxu0 0
    %645 = vmatpush1.bf16.msra.mxu0 0
    %646 = vmatprep.subr.bf16.mxu0 0
    %647 = vmatpush1.bf16.msra.mxu0 0
    %648 = vmatprep.subr.bf16.mxu0 0
    %649 = vmatpush1.bf16.msra.mxu0 0
    %650 = vmatprep.subr.bf16.mxu0 0
    %651 = vmatpush1.bf16.msra.mxu0 0
    %652 = vmatprep.subr.bf16.mxu0 0
    %653 = vmatpush1.bf16.msra.mxu0 0
    %654 = vmatprep.mubr.bf16.mxu0 0
    %655 = vmatmul.mubr.bf16.gmra.mrb[0].mxu0 %v620
    %v656 = vpop.f32.mrb[0].mxu0
    %v657 = vadd.f32 0.0, %v656
    %v658 = vpop.f32.mrb[0].mxu0
    %v659 = vpop.f32.mrb[0].mxu0
    %v660 = vpop.f32.mrb[0].mxu0
    %661 = vdwg.mxu0
    %v662 = vadd.f32 %v48, %v657
    %v663 = vpack.c.bf16 %v614, %v614
    %v665 = vrot.slane %v663, 1
    %666 = vrot.lane.b32.xlu0 %v665, 32
    %v667 = vpop.permute.xlu0 %666
    %v669 = vsel %vm122, %v667, 0
    %671 = vmatprep.subr.bf16.mxu0 0
    %672 = vmatpush1.bf16.msra.mxu0 %v264
    %673 = vmatprep.subr.bf16.mxu0 0
    %674 = vmatpush1.bf16.msra.mxu0 %v265
    %675 = vmatprep.subr.bf16.mxu0 0
    %676 = vmatpush1.bf16.msra.mxu0 0
    %677 = vmatprep.subr.bf16.mxu0 0
    %678 = vmatpush1.bf16.msra.mxu0 0
    %679 = vmatprep.subr.bf16.mxu0 0
    %680 = vmatpush1.bf16.msra.mxu0 0
    %681 = vmatprep.subr.bf16.mxu0 0
    %682 = vmatpush1.bf16.msra.mxu0 0
    %683 = vmatprep.subr.bf16.mxu0 0
    %684 = vmatpush1.bf16.msra.mxu0 0
    %685 = vmatprep.subr.bf16.mxu0 0
    %686 = vmatpush1.bf16.msra.mxu0 0
    %687 = vmatprep.subr.bf16.mxu0 0
    %688 = vmatpush1.bf16.msra.mxu0 0
    %689 = vmatprep.subr.bf16.mxu0 0
    %690 = vmatpush1.bf16.msra.mxu0 0
    %691 = vmatprep.subr.bf16.mxu0 0
    %692 = vmatpush1.bf16.msra.mxu0 0
    %693 = vmatprep.subr.bf16.mxu0 0
    %694 = vmatpush1.bf16.msra.mxu0 0
    %695 = vmatprep.subr.bf16.mxu0 0
    %696 = vmatpush1.bf16.msra.mxu0 0
    %697 = vmatprep.subr.bf16.mxu0 0
    %698 = vmatpush1.bf16.msra.mxu0 0
    %699 = vmatprep.subr.bf16.mxu0 0
    %700 = vmatpush1.bf16.msra.mxu0 0
    %701 = vmatprep.subr.bf16.mxu0 0
    %702 = vmatpush1.bf16.msra.mxu0 0
    %703 = vmatprep.mubr.bf16.mxu0 0
    %704 = vmatmul.mubr.bf16.gmra.mrb[0].mxu0 %v669
    %v705 = vpop.f32.mrb[0].mxu0
    %v706 = vadd.f32 0.0, %v705
    %v707 = vpop.f32.mrb[0].mxu0
    %v708 = vpop.f32.mrb[0].mxu0
    %v709 = vpop.f32.mrb[0].mxu0
    %710 = vdwg.mxu0
    %v711 = vadd.f32 %v662, %v706
    %v712 = vxor.u32 %v711, 2147483648
    %v713 = vmul.f32 %v712, 1.442695
    %v714 = vpow.pop %v713
    %v715 = vadd.f32 %v714, 1.0
    %v716 = vrcp.pop %v715
    %v717 = vmul.f32 1.0, %v716
    %v718 = vtanh.pop %v711
    %v719 = vmul.f32 %v717, %v532
    %721 = vrot.lane.b32.xlu0 %v718, 64
    %v722 = vpop.permute.xlu0 %721
    %v724 = vmul.f32 %v717, %v722
    %726 = vrot.lane.b32.xlu0 %v724, 32
    %v727 = vpop.permute.xlu0 %726
    %v729 = vadd.f32 %v719, %v727
    %v730 = vtanh.pop %v729
    %732 = vrot.lane.b32.xlu0 %v730, 64
    %v733 = vpop.permute.xlu0 %732
    %v735 = vmul.f32 %v717, %v733
    %737 = vrot.lane.b32.xlu0 %v735, 32
    %v738 = vpop.permute.xlu0 %737
    %740 = vst.msk [vmem:[#allocation2 + $0x2] sm:$0x1] %vm344, %v738
    %741 = vmatprep.subr.bf16.mxu0 0
    %742 = vmatpush1.bf16.msra.mxu0 %v118
    %743 = vmatprep.subr.bf16.mxu0 0
    %744 = vmatpush1.bf16.msra.mxu0 %v119
    %745 = vmatprep.subr.bf16.mxu0 0
    %746 = vmatpush1.bf16.msra.mxu0 0
    %747 = vmatprep.subr.bf16.mxu0 0
    %748 = vmatpush1.bf16.msra.mxu0 0
    %749 = vmatprep.subr.bf16.mxu0 0
    %750 = vmatpush1.bf16.msra.mxu0 0
    %751 = vmatprep.subr.bf16.mxu0 0
    %752 = vmatpush1.bf16.msra.mxu0 0
    %753 = vmatprep.subr.bf16.mxu0 0
    %754 = vmatpush1.bf16.msra.mxu0 0
    %755 = vmatprep.subr.bf16.mxu0 0
    %756 = vmatpush1.bf16.msra.mxu0 0
    %757 = vmatprep.subr.bf16.mxu0 0
    %758 = vmatpush1.bf16.msra.mxu0 0
    %759 = vmatprep.subr.bf16.mxu0 0
    %760 = vmatpush1.bf16.msra.mxu0 0
    %761 = vmatprep.subr.bf16.mxu0 0
    %762 = vmatpush1.bf16.msra.mxu0 0
    %763 = vmatprep.subr.bf16.mxu0 0
    %764 = vmatpush1.bf16.msra.mxu0 0
    %765 = vmatprep.subr.bf16.mxu0 0
    %766 = vmatpush1.bf16.msra.mxu0 0
    %767 = vmatprep.subr.bf16.mxu0 0
    %768 = vmatpush1.bf16.msra.mxu0 0
    %769 = vmatprep.subr.bf16.mxu0 0
    %770 = vmatpush1.bf16.msra.mxu0 0
    %771 = vmatprep.subr.bf16.mxu0 0
    %772 = vmatpush1.bf16.msra.mxu0 0
    %773 = vmatprep.mubr.bf16.mxu0 0
    %774 = vmatmul.mubr.bf16.gmra.mrb[0].mxu0 %v669
    %v775 = vpop.f32.mrb[0].mxu0
    %v776 = vadd.f32 0.0, %v775
    %v777 = vpop.f32.mrb[0].mxu0
    %v778 = vpop.f32.mrb[0].mxu0
    %v779 = vpop.f32.mrb[0].mxu0
    %780 = vdwg.mxu0
    %v782 = vrot.slane %v776, 5
    %v784 = vadd.f32 %v104, %v782
    %v785 = vxor.u32 %v784, 2147483648
    %v786 = vmul.f32 %v785, 1.442695
    %v787 = vpow.pop %v786
    %v788 = vadd.f32 %v787, 1.0
    %v789 = vrcp.pop %v788
    %v790 = vmul.f32 1.0, %v789
    %v791 = vtanh.pop %v784
    %v793 = vrot.slane %v608, 7
    %v795 = vmul.f32 %v790, %v793
    %797 = vrot.lane.b32.xlu0 %v791, 64
    %v798 = vpop.permute.xlu0 %797
    %v800 = vmul.f32 %v790, %v798
    %802 = vrot.lane.b32.xlu0 %v800, 32
    %v803 = vpop.permute.xlu0 %802
    %v805 = vadd.f32 %v795, %v803
    %v806 = vtanh.pop %v805
    %808 = vrot.lane.b32.xlu0 %v806, 64
    %v809 = vpop.permute.xlu0 %808
    %v811 = vmul.f32 %v790, %v809
    %v812 = vpack.c.bf16 %v735, %v735
    %814 = vrot.lane.b32.xlu0 %v812, 32
    %v815 = vpop.permute.xlu0 %814
    %v817 = vsel %vm122, %v815, 0
    %819 = vmatprep.subr.bf16.mxu0 0
    %820 = vmatpush1.bf16.msra.mxu0 %v204
    %821 = vmatprep.subr.bf16.mxu0 0
    %822 = vmatpush1.bf16.msra.mxu0 %v205
    %823 = vmatprep.subr.bf16.mxu0 0
    %824 = vmatpush1.bf16.msra.mxu0 0
    %825 = vmatprep.subr.bf16.mxu0 0
    %826 = vmatpush1.bf16.msra.mxu0 0
    %827 = vmatprep.subr.bf16.mxu0 0
    %828 = vmatpush1.bf16.msra.mxu0 0
    %829 = vmatprep.subr.bf16.mxu0 0
    %830 = vmatpush1.bf16.msra.mxu0 0
    %831 = vmatprep.subr.bf16.mxu0 0
    %832 = vmatpush1.bf16.msra.mxu0 0
    %833 = vmatprep.subr.bf16.mxu0 0
    %834 = vmatpush1.bf16.msra.mxu0 0
    %835 = vmatprep.subr.bf16.mxu0 0
    %836 = vmatpush1.bf16.msra.mxu0 0
    %837 = vmatprep.subr.bf16.mxu0 0
    %838 = vmatpush1.bf16.msra.mxu0 0
    %839 = vmatprep.subr.bf16.mxu0 0
    %840 = vmatpush1.bf16.msra.mxu0 0
    %841 = vmatprep.subr.bf16.mxu0 0
    %842 = vmatpush1.bf16.msra.mxu0 0
    %843 = vmatprep.subr.bf16.mxu0 0
    %844 = vmatpush1.bf16.msra.mxu0 0
    %845 = vmatprep.subr.bf16.mxu0 0
    %846 = vmatpush1.bf16.msra.mxu0 0
    %847 = vmatprep.subr.bf16.mxu0 0
    %848 = vmatpush1.bf16.msra.mxu0 0
    %849 = vmatprep.subr.bf16.mxu0 0
    %850 = vmatpush1.bf16.msra.mxu0 0
    %851 = vmatprep.mubr.bf16.mxu0 0
    %852 = vmatmul.mubr.bf16.gmra.mrb[0].mxu0 %v817
    %v853 = vpop.f32.mrb[0].mxu0
    %v854 = vadd.f32 0.0, %v853
    %v855 = vpop.f32.mrb[0].mxu0
    %v856 = vpop.f32.mrb[0].mxu0
    %v857 = vpop.f32.mrb[0].mxu0
    %858 = vdwg.mxu0
    %v859 = vadd.f32 %v48, %v854
    %v860 = vpack.c.bf16 %v811, %v811
    %v862 = vshrl.u32 %v860, 16
    %v864 = vrot.slane %v862, 1
    %865 = vrot.lane.b32.xlu0 %v864, 32
    %v866 = vpop.permute.xlu0 %865
    %v868 = vsel %vm122, %v866, 0
    %870 = vmatprep.subr.bf16.mxu0 0
    %871 = vmatpush1.bf16.msra.mxu0 %v264
    %872 = vmatprep.subr.bf16.mxu0 0
    %873 = vmatpush1.bf16.msra.mxu0 %v265
    %874 = vmatprep.subr.bf16.mxu0 0
    %875 = vmatpush1.bf16.msra.mxu0 0
    %876 = vmatprep.subr.bf16.mxu0 0
    %877 = vmatpush1.bf16.msra.mxu0 0
    %878 = vmatprep.subr.bf16.mxu0 0
    %879 = vmatpush1.bf16.msra.mxu0 0
    %880 = vmatprep.subr.bf16.mxu0 0
    %881 = vmatpush1.bf16.msra.mxu0 0
    %882 = vmatprep.subr.bf16.mxu0 0
    %883 = vmatpush1.bf16.msra.mxu0 0
    %884 = vmatprep.subr.bf16.mxu0 0
    %885 = vmatpush1.bf16.msra.mxu0 0
    %886 = vmatprep.subr.bf16.mxu0 0
    %887 = vmatpush1.bf16.msra.mxu0 0
    %888 = vmatprep.subr.bf16.mxu0 0
    %889 = vmatpush1.bf16.msra.mxu0 0
    %890 = vmatprep.subr.bf16.mxu0 0
    %891 = vmatpush1.bf16.msra.mxu0 0
    %892 = vmatprep.subr.bf16.mxu0 0
    %893 = vmatpush1.bf16.msra.mxu0 0
    %894 = vmatprep.subr.bf16.mxu0 0
    %895 = vmatpush1.bf16.msra.mxu0 0
    %896 = vmatprep.subr.bf16.mxu0 0
    %897 = vmatpush1.bf16.msra.mxu0 0
    %898 = vmatprep.subr.bf16.mxu0 0
    %899 = vmatpush1.bf16.msra.mxu0 0
    %900 = vmatprep.subr.bf16.mxu0 0
    %901 = vmatpush1.bf16.msra.mxu0 0
    %902 = vmatprep.mubr.bf16.mxu0 0
    %903 = vmatmul.mubr.bf16.gmra.mrb[0].mxu0 %v868
    %v904 = vpop.f32.mrb[0].mxu0
    %v905 = vadd.f32 0.0, %v904
    %v906 = vpop.f32.mrb[0].mxu0
    %v907 = vpop.f32.mrb[0].mxu0
    %v908 = vpop.f32.mrb[0].mxu0
    %909 = vdwg.mxu0
    %v910 = vadd.f32 %v859, %v905
    %v911 = vxor.u32 %v910, 2147483648
    %v912 = vmul.f32 %v911, 1.442695
    %v913 = vpow.pop %v912
    %v914 = vadd.f32 %v913, 1.0
    %v915 = vrcp.pop %v914
    %v916 = vmul.f32 1.0, %v915
    %v917 = vtanh.pop %v910
    %v918 = vmul.f32 %v916, %v729
    %920 = vrot.lane.b32.xlu0 %v917, 64
    %v921 = vpop.permute.xlu0 %920
    %v923 = vmul.f32 %v916, %v921
    %925 = vrot.lane.b32.xlu0 %v923, 32
    %v926 = vpop.permute.xlu0 %925
    %v928 = vadd.f32 %v918, %v926
    %v929 = vtanh.pop %v928
    %931 = vrot.lane.b32.xlu0 %v929, 64
    %v932 = vpop.permute.xlu0 %931
    %v934 = vmul.f32 %v916, %v932
    %936 = vrot.lane.b32.xlu0 %v934, 32
    %v937 = vpop.permute.xlu0 %936
    %939 = vst.msk [vmem:[#allocation2 + $0x3] sm:$0x1] %vm344, %v937
    %940 = vmatprep.subr.bf16.mxu0 0
    %941 = vmatpush1.bf16.msra.mxu0 %v118
    %942 = vmatprep.subr.bf16.mxu0 0
    %943 = vmatpush1.bf16.msra.mxu0 %v119
    %944 = vmatprep.subr.bf16.mxu0 0
    %945 = vmatpush1.bf16.msra.mxu0 0
    %946 = vmatprep.subr.bf16.mxu0 0
    %947 = vmatpush1.bf16.msra.mxu0 0
    %948 = vmatprep.subr.bf16.mxu0 0
    %949 = vmatpush1.bf16.msra.mxu0 0
    %950 = vmatprep.subr.bf16.mxu0 0
    %951 = vmatpush1.bf16.msra.mxu0 0
    %952 = vmatprep.subr.bf16.mxu0 0
    %953 = vmatpush1.bf16.msra.mxu0 0
    %954 = vmatprep.subr.bf16.mxu0 0
    %955 = vmatpush1.bf16.msra.mxu0 0
    %956 = vmatprep.subr.bf16.mxu0 0
    %957 = vmatpush1.bf16.msra.mxu0 0
    %958 = vmatprep.subr.bf16.mxu0 0
    %959 = vmatpush1.bf16.msra.mxu0 0
    %960 = vmatprep.subr.bf16.mxu0 0
    %961 = vmatpush1.bf16.msra.mxu0 0
    %962 = vmatprep.subr.bf16.mxu0 0
    %963 = vmatpush1.bf16.msra.mxu0 0
    %964 = vmatprep.subr.bf16.mxu0 0
    %965 = vmatpush1.bf16.msra.mxu0 0
    %966 = vmatprep.subr.bf16.mxu0 0
    %967 = vmatpush1.bf16.msra.mxu0 0
    %968 = vmatprep.subr.bf16.mxu0 0
    %969 = vmatpush1.bf16.msra.mxu0 0
    %970 = vmatprep.subr.bf16.mxu0 0
    %971 = vmatpush1.bf16.msra.mxu0 0
    %972 = vmatprep.mubr.bf16.mxu0 0
    %973 = vmatmul.mubr.bf16.gmra.mrb[0].mxu0 %v868
    %v974 = vpop.f32.mrb[0].mxu0
    %v975 = vadd.f32 0.0, %v974
    %v976 = vpop.f32.mrb[0].mxu0
    %v977 = vpop.f32.mrb[0].mxu0
    %v978 = vpop.f32.mrb[0].mxu0
    %979 = vdwg.mxu0
    %v981 = vrot.slane %v975, 4
    %v983 = vadd.f32 %v104, %v981
    %v984 = vxor.u32 %v983, 2147483648
    %v985 = vmul.f32 %v984, 1.442695
    %v986 = vpow.pop %v985
    %v987 = vadd.f32 %v986, 1.0
    %v988 = vrcp.pop %v987
    %v989 = vmul.f32 1.0, %v988
    %v990 = vtanh.pop %v983
    %v992 = vrot.slane %v805, 7
    %v994 = vmul.f32 %v989, %v992
    %996 = vrot.lane.b32.xlu0 %v990, 64
    %v997 = vpop.permute.xlu0 %996
    %v999 = vmul.f32 %v989, %v997
    %1001 = vrot.lane.b32.xlu0 %v999, 32
    %v1002 = vpop.permute.xlu0 %1001
    %v1004 = vadd.f32 %v994, %v1002
    %v1005 = vtanh.pop %v1004
    %1007 = vrot.lane.b32.xlu0 %v1005, 64
    %v1008 = vpop.permute.xlu0 %1007
    %v1010 = vmul.f32 %v989, %v1008
    %v1011 = vpack.c.bf16 %v934, %v934
    %1013 = vrot.lane.b32.xlu0 %v1011, 32
    %v1014 = vpop.permute.xlu0 %1013
    %v1016 = vsel %vm122, %v1014, 0
    %1018 = vmatprep.subr.bf16.mxu0 0
    %1019 = vmatpush1.bf16.msra.mxu0 %v204
    %1020 = vmatprep.subr.bf16.mxu0 0
    %1021 = vmatpush1.bf16.msra.mxu0 %v205
    %1022 = vmatprep.subr.bf16.mxu0 0
    %1023 = vmatpush1.bf16.msra.mxu0 0
    %1024 = vmatprep.subr.bf16.mxu0 0
    %1025 = vmatpush1.bf16.msra.mxu0 0
    %1026 = vmatprep.subr.bf16.mxu0 0
    %1027 = vmatpush1.bf16.msra.mxu0 0
    %1028 = vmatprep.subr.bf16.mxu0 0
    %1029 = vmatpush1.bf16.msra.mxu0 0
    %1030 = vmatprep.subr.bf16.mxu0 0
    %1031 = vmatpush1.bf16.msra.mxu0 0
    %1032 = vmatprep.subr.bf16.mxu0 0
    %1033 = vmatpush1.bf16.msra.mxu0 0
    %1034 = vmatprep.subr.bf16.mxu0 0
    %1035 = vmatpush1.bf16.msra.mxu0 0
    %1036 = vmatprep.subr.bf16.mxu0 0
    %1037 = vmatpush1.bf16.msra.mxu0 0
    %1038 = vmatprep.subr.bf16.mxu0 0
    %1039 = vmatpush1.bf16.msra.mxu0 0
    %1040 = vmatprep.subr.bf16.mxu0 0
    %1041 = vmatpush1.bf16.msra.mxu0 0
    %1042 = vmatprep.subr.bf16.mxu0 0
    %1043 = vmatpush1.bf16.msra.mxu0 0
    %1044 = vmatprep.subr.bf16.mxu0 0
    %1045 = vmatpush1.bf16.msra.mxu0 0
    %1046 = vmatprep.subr.bf16.mxu0 0
    %1047 = vmatpush1.bf16.msra.mxu0 0
    %1048 = vmatprep.subr.bf16.mxu0 0
    %1049 = vmatpush1.bf16.msra.mxu0 0
    %1050 = vmatprep.mubr.bf16.mxu0 0
    %1051 = vmatmul.mubr.bf16.gmra.mrb[0].mxu0 %v1016
    %v1052 = vpop.f32.mrb[0].mxu0
    %v1053 = vadd.f32 0.0, %v1052
    %v1054 = vpop.f32.mrb[0].mxu0
    %v1055 = vpop.f32.mrb[0].mxu0
    %v1056 = vpop.f32.mrb[0].mxu0
    %1057 = vdwg.mxu0
    %v1058 = vadd.f32 %v48, %v1053
    %v1059 = vpack.c.bf16 %v1010, %v1010
    %v1061 = vrot.slane %v1059, 2
    %1062 = vrot.lane.b32.xlu0 %v1061, 32
    %v1063 = vpop.permute.xlu0 %1062
    %v1065 = vsel %vm122, %v1063, 0
    %1067 = vmatprep.subr.bf16.mxu0 0
    %1068 = vmatpush1.bf16.msra.mxu0 %v264
    %1069 = vmatprep.subr.bf16.mxu0 0
    %1070 = vmatpush1.bf16.msra.mxu0 %v265
    %1071 = vmatprep.subr.bf16.mxu0 0
    %1072 = vmatpush1.bf16.msra.mxu0 0
    %1073 = vmatprep.subr.bf16.mxu0 0
    %1074 = vmatpush1.bf16.msra.mxu0 0
    %1075 = vmatprep.subr.bf16.mxu0 0
    %1076 = vmatpush1.bf16.msra.mxu0 0
    %1077 = vmatprep.subr.bf16.mxu0 0
    %1078 = vmatpush1.bf16.msra.mxu0 0
    %1079 = vmatprep.subr.bf16.mxu0 0
    %1080 = vmatpush1.bf16.msra.mxu0 0
    %1081 = vmatprep.subr.bf16.mxu0 0
    %1082 = vmatpush1.bf16.msra.mxu0 0
    %1083 = vmatprep.subr.bf16.mxu0 0
    %1084 = vmatpush1.bf16.msra.mxu0 0
    %1085 = vmatprep.subr.bf16.mxu0 0
    %1086 = vmatpush1.bf16.msra.mxu0 0
    %1087 = vmatprep.subr.bf16.mxu0 0
    %1088 = vmatpush1.bf16.msra.mxu0 0
    %1089 = vmatprep.subr.bf16.mxu0 0
    %1090 = vmatpush1.bf16.msra.mxu0 0
    %1091 = vmatprep.subr.bf16.mxu0 0
    %1092 = vmatpush1.bf16.msra.mxu0 0
    %1093 = vmatprep.subr.bf16.mxu0 0
    %1094 = vmatpush1.bf16.msra.mxu0 0
    %1095 = vmatprep.subr.bf16.mxu0 0
    %1096 = vmatpush1.bf16.msra.mxu0 0
    %1097 = vmatprep.subr.bf16.mxu0 0
    %1098 = vmatpush1.bf16.msra.mxu0 0
    %1099 = vmatprep.mubr.bf16.mxu0 0
    %1100 = vmatmul.mubr.bf16.gmra.mrb[0].mxu0 %v1065
    %v1101 = vpop.f32.mrb[0].mxu0
    %v1102 = vadd.f32 0.0, %v1101
    %v1103 = vpop.f32.mrb[0].mxu0
    %v1104 = vpop.f32.mrb[0].mxu0
    %v1105 = vpop.f32.mrb[0].mxu0
    %1106 = vdwg.mxu0
    %v1107 = vadd.f32 %v1058, %v1102
    %v1108 = vxor.u32 %v1107, 2147483648
    %v1109 = vmul.f32 %v1108, 1.442695
    %v1110 = vpow.pop %v1109
    %v1111 = vadd.f32 %v1110, 1.0
    %v1112 = vrcp.pop %v1111
    %v1113 = vmul.f32 1.0, %v1112
    %v1114 = vtanh.pop %v1107
    %v1115 = vmul.f32 %v1113, %v928
    %1117 = vrot.lane.b32.xlu0 %v1114, 64
    %v1118 = vpop.permute.xlu0 %1117
    %v1120 = vmul.f32 %v1113, %v1118
    %1122 = vrot.lane.b32.xlu0 %v1120, 32
    %v1123 = vpop.permute.xlu0 %1122
    %v1125 = vadd.f32 %v1115, %v1123
    %v1126 = vtanh.pop %v1125
    %1128 = vrot.lane.b32.xlu0 %v1126, 64
    %v1129 = vpop.permute.xlu0 %1128
    %v1131 = vmul.f32 %v1113, %v1129
    %1133 = vrot.lane.b32.xlu0 %v1131, 32
    %v1134 = vpop.permute.xlu0 %1133
    %1136 = vst.msk [vmem:[#allocation2 + $0x4] sm:$0x1] %vm344, %v1134
    %1137 = vmatprep.subr.bf16.mxu0 0
    %1138 = vmatpush1.bf16.msra.mxu0 %v118
    %1139 = vmatprep.subr.bf16.mxu0 0
    %1140 = vmatpush1.bf16.msra.mxu0 %v119
    %1141 = vmatprep.subr.bf16.mxu0 0
    %1142 = vmatpush1.bf16.msra.mxu0 0
    %1143 = vmatprep.subr.bf16.mxu0 0
    %1144 = vmatpush1.bf16.msra.mxu0 0
    %1145 = vmatprep.subr.bf16.mxu0 0
    %1146 = vmatpush1.bf16.msra.mxu0 0
    %1147 = vmatprep.subr.bf16.mxu0 0
    %1148 = vmatpush1.bf16.msra.mxu0 0
    %1149 = vmatprep.subr.bf16.mxu0 0
    %1150 = vmatpush1.bf16.msra.mxu0 0
    %1151 = vmatprep.subr.bf16.mxu0 0
    %1152 = vmatpush1.bf16.msra.mxu0 0
    %1153 = vmatprep.subr.bf16.mxu0 0
    %1154 = vmatpush1.bf16.msra.mxu0 0
    %1155 = vmatprep.subr.bf16.mxu0 0
    %1156 = vmatpush1.bf16.msra.mxu0 0
    %1157 = vmatprep.subr.bf16.mxu0 0
    %1158 = vmatpush1.bf16.msra.mxu0 0
    %1159 = vmatprep.subr.bf16.mxu0 0
    %1160 = vmatpush1.bf16.msra.mxu0 0
    %1161 = vmatprep.subr.bf16.mxu0 0
    %1162 = vmatpush1.bf16.msra.mxu0 0
    %1163 = vmatprep.subr.bf16.mxu0 0
    %1164 = vmatpush1.bf16.msra.mxu0 0
    %1165 = vmatprep.subr.bf16.mxu0 0
    %1166 = vmatpush1.bf16.msra.mxu0 0
    %1167 = vmatprep.subr.bf16.mxu0 0
    %1168 = vmatpush1.bf16.msra.mxu0 0
    %1169 = vmatprep.mubr.bf16.mxu0 0
    %1170 = vmatmul.mubr.bf16.gmra.mrb[0].mxu0 %v1065
    %v1171 = vpop.f32.mrb[0].mxu0
    %v1172 = vadd.f32 0.0, %v1171
    %v1173 = vpop.f32.mrb[0].mxu0
    %v1174 = vpop.f32.mrb[0].mxu0
    %v1175 = vpop.f32.mrb[0].mxu0
    %1176 = vdwg.mxu0
    %v1178 = vrot.slane %v1172, 3
    %v1180 = vadd.f32 %v104, %v1178
    %v1181 = vxor.u32 %v1180, 2147483648
    %v1182 = vmul.f32 %v1181, 1.442695
    %v1183 = vpow.pop %v1182
    %v1184 = vadd.f32 %v1183, 1.0
    %v1185 = vrcp.pop %v1184
    %v1186 = vmul.f32 1.0, %v1185
    %v1187 = vtanh.pop %v1180
    %v1189 = vrot.slane %v1004, 7
    %v1191 = vmul.f32 %v1186, %v1189
    %1193 = vrot.lane.b32.xlu0 %v1187, 64
    %v1194 = vpop.permute.xlu0 %1193
    %v1196 = vmul.f32 %v1186, %v1194
    %1198 = vrot.lane.b32.xlu0 %v1196, 32
    %v1199 = vpop.permute.xlu0 %1198
    %v1201 = vadd.f32 %v1191, %v1199
    %v1202 = vtanh.pop %v1201
    %1204 = vrot.lane.b32.xlu0 %v1202, 64
    %v1205 = vpop.permute.xlu0 %1204
    %v1207 = vmul.f32 %v1186, %v1205
    %v1208 = vpack.c.bf16 %v1131, %v1131
    %1210 = vrot.lane.b32.xlu0 %v1208, 32
    %v1211 = vpop.permute.xlu0 %1210
    %v1213 = vsel %vm122, %v1211, 0
    %1215 = vmatprep.subr.bf16.mxu0 0
    %1216 = vmatpush1.bf16.msra.mxu0 %v204
    %1217 = vmatprep.subr.bf16.mxu0 0
    %1218 = vmatpush1.bf16.msra.mxu0 %v205
    %1219 = vmatprep.subr.bf16.mxu0 0
    %1220 = vmatpush1.bf16.msra.mxu0 0
    %1221 = vmatprep.subr.bf16.mxu0 0
    %1222 = vmatpush1.bf16.msra.mxu0 0
    %1223 = vmatprep.subr.bf16.mxu0 0
    %1224 = vmatpush1.bf16.msra.mxu0 0
    %1225 = vmatprep.subr.bf16.mxu0 0
    %1226 = vmatpush1.bf16.msra.mxu0 0
    %1227 = vmatprep.subr.bf16.mxu0 0
    %1228 = vmatpush1.bf16.msra.mxu0 0
    %1229 = vmatprep.subr.bf16.mxu0 0
    %1230 = vmatpush1.bf16.msra.mxu0 0
    %1231 = vmatprep.subr.bf16.mxu0 0
    %1232 = vmatpush1.bf16.msra.mxu0 0
    %1233 = vmatprep.subr.bf16.mxu0 0
    %1234 = vmatpush1.bf16.msra.mxu0 0
    %1235 = vmatprep.subr.bf16.mxu0 0
    %1236 = vmatpush1.bf16.msra.mxu0 0
    %1237 = vmatprep.subr.bf16.mxu0 0
    %1238 = vmatpush1.bf16.msra.mxu0 0
    %1239 = vmatprep.subr.bf16.mxu0 0
    %1240 = vmatpush1.bf16.msra.mxu0 0
    %1241 = vmatprep.subr.bf16.mxu0 0
    %1242 = vmatpush1.bf16.msra.mxu0 0
    %1243 = vmatprep.subr.bf16.mxu0 0
    %1244 = vmatpush1.bf16.msra.mxu0 0
    %1245 = vmatprep.subr.bf16.mxu0 0
    %1246 = vmatpush1.bf16.msra.mxu0 0
    %1247 = vmatprep.mubr.bf16.mxu0 0
    %1248 = vmatmul.mubr.bf16.gmra.mrb[0].mxu0 %v1213
    %v1249 = vpop.f32.mrb[0].mxu0
    %v1250 = vadd.f32 0.0, %v1249
    %v1251 = vpop.f32.mrb[0].mxu0
    %v1252 = vpop.f32.mrb[0].mxu0
    %v1253 = vpop.f32.mrb[0].mxu0
    %1254 = vdwg.mxu0
    %v1255 = vadd.f32 %v48, %v1250
    %v1256 = vpack.c.bf16 %v1207, %v1207
    %v1258 = vshrl.u32 %v1256, 16
    %v1260 = vrot.slane %v1258, 2
    %1261 = vrot.lane.b32.xlu0 %v1260, 32
    %v1262 = vpop.permute.xlu0 %1261
    %v1264 = vsel %vm122, %v1262, 0
    %1266 = vmatprep.subr.bf16.mxu0 0
    %1267 = vmatpush1.bf16.msra.mxu0 %v264
    %1268 = vmatprep.subr.bf16.mxu0 0
    %1269 = vmatpush1.bf16.msra.mxu0 %v265
    %1270 = vmatprep.subr.bf16.mxu0 0
    %1271 = vmatpush1.bf16.msra.mxu0 0
    %1272 = vmatprep.subr.bf16.mxu0 0
    %1273 = vmatpush1.bf16.msra.mxu0 0
    %1274 = vmatprep.subr.bf16.mxu0 0
    %1275 = vmatpush1.bf16.msra.mxu0 0
    %1276 = vmatprep.subr.bf16.mxu0 0
    %1277 = vmatpush1.bf16.msra.mxu0 0
    %1278 = vmatprep.subr.bf16.mxu0 0
    %1279 = vmatpush1.bf16.msra.mxu0 0
    %1280 = vmatprep.subr.bf16.mxu0 0
    %1281 = vmatpush1.bf16.msra.mxu0 0
    %1282 = vmatprep.subr.bf16.mxu0 0
    %1283 = vmatpush1.bf16.msra.mxu0 0
    %1284 = vmatprep.subr.bf16.mxu0 0
    %1285 = vmatpush1.bf16.msra.mxu0 0
    %1286 = vmatprep.subr.bf16.mxu0 0
    %1287 = vmatpush1.bf16.msra.mxu0 0
    %1288 = vmatprep.subr.bf16.mxu0 0
    %1289 = vmatpush1.bf16.msra.mxu0 0
    %1290 = vmatprep.subr.bf16.mxu0 0
    %1291 = vmatpush1.bf16.msra.mxu0 0
    %1292 = vmatprep.subr.bf16.mxu0 0
    %1293 = vmatpush1.bf16.msra.mxu0 0
    %1294 = vmatprep.subr.bf16.mxu0 0
    %1295 = vmatpush1.bf16.msra.mxu0 0
    %1296 = vmatprep.subr.bf16.mxu0 0
    %1297 = vmatpush1.bf16.msra.mxu0 0
    %1298 = vmatprep.mubr.bf16.mxu0 0
    %1299 = vmatmul.mubr.bf16.gmra.mrb[0].mxu0 %v1264
    %v1300 = vpop.f32.mrb[0].mxu0
    %v1301 = vadd.f32 0.0, %v1300
    %v1302 = vpop.f32.mrb[0].mxu0
    %v1303 = vpop.f32.mrb[0].mxu0
    %v1304 = vpop.f32.mrb[0].mxu0
    %1305 = vdwg.mxu0
    %v1306 = vadd.f32 %v1255, %v1301
    %v1307 = vxor.u32 %v1306, 2147483648
    %v1308 = vmul.f32 %v1307, 1.442695
    %v1309 = vpow.pop %v1308
    %v1310 = vadd.f32 %v1309, 1.0
    %v1311 = vrcp.pop %v1310
    %v1312 = vmul.f32 1.0, %v1311
    %v1313 = vtanh.pop %v1306
    %v1314 = vmul.f32 %v1312, %v1125
    %1316 = vrot.lane.b32.xlu0 %v1313, 64
    %v1317 = vpop.permute.xlu0 %1316
    %v1319 = vmul.f32 %v1312, %v1317
    %1321 = vrot.lane.b32.xlu0 %v1319, 32
    %v1322 = vpop.permute.xlu0 %1321
    %v1324 = vadd.f32 %v1314, %v1322
    %v1325 = vtanh.pop %v1324
    %1327 = vrot.lane.b32.xlu0 %v1325, 64
    %v1328 = vpop.permute.xlu0 %1327
    %v1330 = vmul.f32 %v1312, %v1328
    %1332 = vrot.lane.b32.xlu0 %v1330, 32
    %v1333 = vpop.permute.xlu0 %1332
    %1335 = vst.msk [vmem:[#allocation2 + $0x5] sm:$0x1] %vm344, %v1333
    %1336 = vmatprep.subr.bf16.mxu0 0
    %1337 = vmatpush1.bf16.msra.mxu0 %v118
    %1338 = vmatprep.subr.bf16.mxu0 0
    %1339 = vmatpush1.bf16.msra.mxu0 %v119
    %1340 = vmatprep.subr.bf16.mxu0 0
    %1341 = vmatpush1.bf16.msra.mxu0 0
    %1342 = vmatprep.subr.bf16.mxu0 0
    %1343 = vmatpush1.bf16.msra.mxu0 0
    %1344 = vmatprep.subr.bf16.mxu0 0
    %1345 = vmatpush1.bf16.msra.mxu0 0
    %1346 = vmatprep.subr.bf16.mxu0 0
    %1347 = vmatpush1.bf16.msra.mxu0 0
    %1348 = vmatprep.subr.bf16.mxu0 0
    %1349 = vmatpush1.bf16.msra.mxu0 0
    %1350 = vmatprep.subr.bf16.mxu0 0
    %1351 = vmatpush1.bf16.msra.mxu0 0
    %1352 = vmatprep.subr.bf16.mxu0 0
    %1353 = vmatpush1.bf16.msra.mxu0 0
    %1354 = vmatprep.subr.bf16.mxu0 0
    %1355 = vmatpush1.bf16.msra.mxu0 0
    %1356 = vmatprep.subr.bf16.mxu0 0
    %1357 = vmatpush1.bf16.msra.mxu0 0
    %1358 = vmatprep.subr.bf16.mxu0 0
    %1359 = vmatpush1.bf16.msra.mxu0 0
    %1360 = vmatprep.subr.bf16.mxu0 0
    %1361 = vmatpush1.bf16.msra.mxu0 0
    %1362 = vmatprep.subr.bf16.mxu0 0
    %1363 = vmatpush1.bf16.msra.mxu0 0
    %1364 = vmatprep.subr.bf16.mxu0 0
    %1365 = vmatpush1.bf16.msra.mxu0 0
    %1366 = vmatprep.subr.bf16.mxu0 0
    %1367 = vmatpush1.bf16.msra.mxu0 0
    %1368 = vmatprep.mubr.bf16.mxu0 0
    %1369 = vmatmul.mubr.bf16.gmra.mrb[0].mxu0 %v1264
    %v1370 = vpop.f32.mrb[0].mxu0
    %v1371 = vadd.f32 0.0, %v1370
    %v1372 = vpop.f32.mrb[0].mxu0
    %v1373 = vpop.f32.mrb[0].mxu0
    %v1374 = vpop.f32.mrb[0].mxu0
    %1375 = vdwg.mxu0
    %v1377 = vrot.slane %v1371, 2
    %v1379 = vadd.f32 %v104, %v1377
    %v1380 = vxor.u32 %v1379, 2147483648
    %v1381 = vmul.f32 %v1380, 1.442695
    %v1382 = vpow.pop %v1381
    %v1383 = vadd.f32 %v1382, 1.0
    %v1384 = vrcp.pop %v1383
    %v1385 = vmul.f32 1.0, %v1384
    %v1386 = vtanh.pop %v1379
    %v1388 = vrot.slane %v1201, 7
    %v1390 = vmul.f32 %v1385, %v1388
    %1392 = vrot.lane.b32.xlu0 %v1386, 64
    %v1393 = vpop.permute.xlu0 %1392
    %v1395 = vmul.f32 %v1385, %v1393
    %1397 = vrot.lane.b32.xlu0 %v1395, 32
    %v1398 = vpop.permute.xlu0 %1397
    %v1400 = vadd.f32 %v1390, %v1398
    %v1401 = vtanh.pop %v1400
    %1403 = vrot.lane.b32.xlu0 %v1401, 64
    %v1404 = vpop.permute.xlu0 %1403
    %v1406 = vmul.f32 %v1385, %v1404
    %v1407 = vpack.c.bf16 %v1330, %v1330
    %1409 = vrot.lane.b32.xlu0 %v1407, 32
    %v1410 = vpop.permute.xlu0 %1409
    %v1412 = vsel %vm122, %v1410, 0
    %1414 = vmatprep.subr.bf16.mxu0 0
    %1415 = vmatpush1.bf16.msra.mxu0 %v204
    %1416 = vmatprep.subr.bf16.mxu0 0
    %1417 = vmatpush1.bf16.msra.mxu0 %v205
    %1418 = vmatprep.subr.bf16.mxu0 0
    %1419 = vmatpush1.bf16.msra.mxu0 0
    %1420 = vmatprep.subr.bf16.mxu0 0
    %1421 = vmatpush1.bf16.msra.mxu0 0
    %1422 = vmatprep.subr.bf16.mxu0 0
    %1423 = vmatpush1.bf16.msra.mxu0 0
    %1424 = vmatprep.subr.bf16.mxu0 0
    %1425 = vmatpush1.bf16.msra.mxu0 0
    %1426 = vmatprep.subr.bf16.mxu0 0
    %1427 = vmatpush1.bf16.msra.mxu0 0
    %1428 = vmatprep.subr.bf16.mxu0 0
    %1429 = vmatpush1.bf16.msra.mxu0 0
    %1430 = vmatprep.subr.bf16.mxu0 0
    %1431 = vmatpush1.bf16.msra.mxu0 0
    %1432 = vmatprep.subr.bf16.mxu0 0
    %1433 = vmatpush1.bf16.msra.mxu0 0
    %1434 = vmatprep.subr.bf16.mxu0 0
    %1435 = vmatpush1.bf16.msra.mxu0 0
    %1436 = vmatprep.subr.bf16.mxu0 0
    %1437 = vmatpush1.bf16.msra.mxu0 0
    %1438 = vmatprep.subr.bf16.mxu0 0
    %1439 = vmatpush1.bf16.msra.mxu0 0
    %1440 = vmatprep.subr.bf16.mxu0 0
    %1441 = vmatpush1.bf16.msra.mxu0 0
    %1442 = vmatprep.subr.bf16.mxu0 0
    %1443 = vmatpush1.bf16.msra.mxu0 0
    %1444 = vmatprep.subr.bf16.mxu0 0
    %1445 = vmatpush1.bf16.msra.mxu0 0
    %1446 = vmatprep.mubr.bf16.mxu0 0
    %1447 = vmatmul.mubr.bf16.gmra.mrb[0].mxu0 %v1412
    %v1448 = vpop.f32.mrb[0].mxu0
    %v1449 = vadd.f32 0.0, %v1448
    %v1450 = vpop.f32.mrb[0].mxu0
    %v1451 = vpop.f32.mrb[0].mxu0
    %v1452 = vpop.f32.mrb[0].mxu0
    %1453 = vdwg.mxu0
    %v1454 = vadd.f32 %v48, %v1449
    %v1455 = vpack.c.bf16 %v1406, %v1406
    %v1457 = vrot.slane %v1455, 3
    %1458 = vrot.lane.b32.xlu0 %v1457, 32
    %v1459 = vpop.permute.xlu0 %1458
    %v1461 = vsel %vm122, %v1459, 0
    %1463 = vmatprep.subr.bf16.mxu0 0
    %1464 = vmatpush1.bf16.msra.mxu0 %v264
    %1465 = vmatprep.subr.bf16.mxu0 0
    %1466 = vmatpush1.bf16.msra.mxu0 %v265
    %1467 = vmatprep.subr.bf16.mxu0 0
    %1468 = vmatpush1.bf16.msra.mxu0 0
    %1469 = vmatprep.subr.bf16.mxu0 0
    %1470 = vmatpush1.bf16.msra.mxu0 0
    %1471 = vmatprep.subr.bf16.mxu0 0
    %1472 = vmatpush1.bf16.msra.mxu0 0
    %1473 = vmatprep.subr.bf16.mxu0 0
    %1474 = vmatpush1.bf16.msra.mxu0 0
    %1475 = vmatprep.subr.bf16.mxu0 0
    %1476 = vmatpush1.bf16.msra.mxu0 0
    %1477 = vmatprep.subr.bf16.mxu0 0
    %1478 = vmatpush1.bf16.msra.mxu0 0
    %1479 = vmatprep.subr.bf16.mxu0 0
    %1480 = vmatpush1.bf16.msra.mxu0 0
    %1481 = vmatprep.subr.bf16.mxu0 0
    %1482 = vmatpush1.bf16.msra.mxu0 0
    %1483 = vmatprep.subr.bf16.mxu0 0
    %1484 = vmatpush1.bf16.msra.mxu0 0
    %1485 = vmatprep.subr.bf16.mxu0 0
    %1486 = vmatpush1.bf16.msra.mxu0 0
    %1487 = vmatprep.subr.bf16.mxu0 0
    %1488 = vmatpush1.bf16.msra.mxu0 0
    %1489 = vmatprep.subr.bf16.mxu0 0
    %1490 = vmatpush1.bf16.msra.mxu0 0
    %1491 = vmatprep.subr.bf16.mxu0 0
    %1492 = vmatpush1.bf16.msra.mxu0 0
    %1493 = vmatprep.subr.bf16.mxu0 0
    %1494 = vmatpush1.bf16.msra.mxu0 0
    %1495 = vmatprep.mubr.bf16.mxu0 0
    %1496 = vmatmul.mubr.bf16.gmra.mrb[0].mxu0 %v1461
    %v1497 = vpop.f32.mrb[0].mxu0
    %v1498 = vadd.f32 0.0, %v1497
    %v1499 = vpop.f32.mrb[0].mxu0
    %v1500 = vpop.f32.mrb[0].mxu0
    %v1501 = vpop.f32.mrb[0].mxu0
    %1502 = vdwg.mxu0
    %v1503 = vadd.f32 %v1454, %v1498
    %v1504 = vxor.u32 %v1503, 2147483648
    %v1505 = vmul.f32 %v1504, 1.442695
    %v1506 = vpow.pop %v1505
    %v1507 = vadd.f32 %v1506, 1.0
    %v1508 = vrcp.pop %v1507
    %v1509 = vmul.f32 1.0, %v1508
    %v1510 = vtanh.pop %v1503
    %v1511 = vmul.f32 %v1509, %v1324
    %1513 = vrot.lane.b32.xlu0 %v1510, 64
    %v1514 = vpop.permute.xlu0 %1513
    %v1516 = vmul.f32 %v1509, %v1514
    %1518 = vrot.lane.b32.xlu0 %v1516, 32
    %v1519 = vpop.permute.xlu0 %1518
    %v1521 = vadd.f32 %v1511, %v1519
    %v1522 = vtanh.pop %v1521
    %1524 = vrot.lane.b32.xlu0 %v1522, 64
    %v1525 = vpop.permute.xlu0 %1524
    %v1527 = vmul.f32 %v1509, %v1525
    %1529 = vrot.lane.b32.xlu0 %v1527, 32
    %v1530 = vpop.permute.xlu0 %1529
    %1532 = vst.msk [vmem:[#allocation2 + $0x6] sm:$0x1] %vm344, %v1530
    %1533 = vmatprep.subr.bf16.mxu0 0
    %1534 = vmatpush1.bf16.msra.mxu0 %v118
    %1535 = vmatprep.subr.bf16.mxu0 0
    %1536 = vmatpush1.bf16.msra.mxu0 %v119
    %1537 = vmatprep.subr.bf16.mxu0 0
    %1538 = vmatpush1.bf16.msra.mxu0 0
    %1539 = vmatprep.subr.bf16.mxu0 0
    %1540 = vmatpush1.bf16.msra.mxu0 0
    %1541 = vmatprep.subr.bf16.mxu0 0
    %1542 = vmatpush1.bf16.msra.mxu0 0
    %1543 = vmatprep.subr.bf16.mxu0 0
    %1544 = vmatpush1.bf16.msra.mxu0 0
    %1545 = vmatprep.subr.bf16.mxu0 0
    %1546 = vmatpush1.bf16.msra.mxu0 0
    %1547 = vmatprep.subr.bf16.mxu0 0
    %1548 = vmatpush1.bf16.msra.mxu0 0
    %1549 = vmatprep.subr.bf16.mxu0 0
    %1550 = vmatpush1.bf16.msra.mxu0 0
    %1551 = vmatprep.subr.bf16.mxu0 0
    %1552 = vmatpush1.bf16.msra.mxu0 0
    %1553 = vmatprep.subr.bf16.mxu0 0
    %1554 = vmatpush1.bf16.msra.mxu0 0
    %1555 = vmatprep.subr.bf16.mxu0 0
    %1556 = vmatpush1.bf16.msra.mxu0 0
    %1557 = vmatprep.subr.bf16.mxu0 0
    %1558 = vmatpush1.bf16.msra.mxu0 0
    %1559 = vmatprep.subr.bf16.mxu0 0
    %1560 = vmatpush1.bf16.msra.mxu0 0
    %1561 = vmatprep.subr.bf16.mxu0 0
    %1562 = vmatpush1.bf16.msra.mxu0 0
    %1563 = vmatprep.subr.bf16.mxu0 0
    %1564 = vmatpush1.bf16.msra.mxu0 0
    %1565 = vmatprep.mubr.bf16.mxu0 0
    %1566 = vmatmul.mubr.bf16.gmra.mrb[0].mxu0 %v1461
    %v1567 = vpop.f32.mrb[0].mxu0
    %v1568 = vadd.f32 0.0, %v1567
    %v1569 = vpop.f32.mrb[0].mxu0
    %v1570 = vpop.f32.mrb[0].mxu0
    %v1571 = vpop.f32.mrb[0].mxu0
    %1572 = vdwg.mxu0
    %v1574 = vrot.slane %v1568, 1
    %v1576 = vadd.f32 %v104, %v1574
    %v1577 = vxor.u32 %v1576, 2147483648
    %v1578 = vmul.f32 %v1577, 1.442695
    %v1579 = vpow.pop %v1578
    %v1580 = vadd.f32 %v1579, 1.0
    %v1581 = vrcp.pop %v1580
    %v1582 = vmul.f32 1.0, %v1581
    %v1583 = vtanh.pop %v1576
    %v1585 = vrot.slane %v1400, 7
    %v1587 = vmul.f32 %v1582, %v1585
    %1589 = vrot.lane.b32.xlu0 %v1583, 64
    %v1590 = vpop.permute.xlu0 %1589
    %v1592 = vmul.f32 %v1582, %v1590
    %1594 = vrot.lane.b32.xlu0 %v1592, 32
    %v1595 = vpop.permute.xlu0 %1594
    %v1597 = vadd.f32 %v1587, %v1595
    %v1598 = vtanh.pop %v1597
    %1600 = vrot.lane.b32.xlu0 %v1598, 64
    %v1601 = vpop.permute.xlu0 %1600
    %v1603 = vmul.f32 %v1582, %v1601
    %v1604 = vpack.c.bf16 %v1527, %v1527
    %1606 = vrot.lane.b32.xlu0 %v1604, 32
    %v1607 = vpop.permute.xlu0 %1606
    %v1609 = vsel %vm122, %v1607, 0
    %1611 = vmatprep.subr.bf16.mxu0 0
    %1612 = vmatpush1.bf16.msra.mxu0 %v204
    %1613 = vmatprep.subr.bf16.mxu0 0
    %1614 = vmatpush1.bf16.msra.mxu0 %v205
    %1615 = vmatprep.subr.bf16.mxu0 0
    %1616 = vmatpush1.bf16.msra.mxu0 0
    %1617 = vmatprep.subr.bf16.mxu0 0
    %1618 = vmatpush1.bf16.msra.mxu0 0
    %1619 = vmatprep.subr.bf16.mxu0 0
    %1620 = vmatpush1.bf16.msra.mxu0 0
    %1621 = vmatprep.subr.bf16.mxu0 0
    %1622 = vmatpush1.bf16.msra.mxu0 0
    %1623 = vmatprep.subr.bf16.mxu0 0
    %1624 = vmatpush1.bf16.msra.mxu0 0
    %1625 = vmatprep.subr.bf16.mxu0 0
    %1626 = vmatpush1.bf16.msra.mxu0 0
    %1627 = vmatprep.subr.bf16.mxu0 0
    %1628 = vmatpush1.bf16.msra.mxu0 0
    %1629 = vmatprep.subr.bf16.mxu0 0
    %1630 = vmatpush1.bf16.msra.mxu0 0
    %1631 = vmatprep.subr.bf16.mxu0 0
    %1632 = vmatpush1.bf16.msra.mxu0 0
    %1633 = vmatprep.subr.bf16.mxu0 0
    %1634 = vmatpush1.bf16.msra.mxu0 0
    %1635 = vmatprep.subr.bf16.mxu0 0
    %1636 = vmatpush1.bf16.msra.mxu0 0
    %1637 = vmatprep.subr.bf16.mxu0 0
    %1638 = vmatpush1.bf16.msra.mxu0 0
    %1639 = vmatprep.subr.bf16.mxu0 0
    %1640 = vmatpush1.bf16.msra.mxu0 0
    %1641 = vmatprep.subr.bf16.mxu0 0
    %1642 = vmatpush1.bf16.msra.mxu0 0
    %1643 = vmatprep.mubr.bf16.mxu0 0
    %1644 = vmatmul.mubr.bf16.gmra.mrb[0].mxu0 %v1609
    %v1645 = vpop.f32.mrb[0].mxu0
    %v1646 = vadd.f32 0.0, %v1645
    %v1647 = vpop.f32.mrb[0].mxu0
    %v1648 = vpop.f32.mrb[0].mxu0
    %v1649 = vpop.f32.mrb[0].mxu0
    %1650 = vdwg.mxu0
    %v1651 = vadd.f32 %v48, %v1646
    %v1652 = vpack.c.bf16 %v1603, %v1603
    %v1654 = vshrl.u32 %v1652, 16
    %v1656 = vrot.slane %v1654, 3
    %1657 = vrot.lane.b32.xlu0 %v1656, 32
    %v1658 = vpop.permute.xlu0 %1657
    %v1660 = vsel %vm122, %v1658, 0
    %1662 = vmatprep.subr.bf16.mxu0 0
    %1663 = vmatpush1.bf16.msra.mxu0 %v264
    %1664 = vmatprep.subr.bf16.mxu0 0
    %1665 = vmatpush1.bf16.msra.mxu0 %v265
    %1666 = vmatprep.subr.bf16.mxu0 0
    %1667 = vmatpush1.bf16.msra.mxu0 0
    %1668 = vmatprep.subr.bf16.mxu0 0
    %1669 = vmatpush1.bf16.msra.mxu0 0
    %1670 = vmatprep.subr.bf16.mxu0 0
    %1671 = vmatpush1.bf16.msra.mxu0 0
    %1672 = vmatprep.subr.bf16.mxu0 0
    %1673 = vmatpush1.bf16.msra.mxu0 0
    %1674 = vmatprep.subr.bf16.mxu0 0
    %1675 = vmatpush1.bf16.msra.mxu0 0
    %1676 = vmatprep.subr.bf16.mxu0 0
    %1677 = vmatpush1.bf16.msra.mxu0 0
    %1678 = vmatprep.subr.bf16.mxu0 0
    %1679 = vmatpush1.bf16.msra.mxu0 0
    %1680 = vmatprep.subr.bf16.mxu0 0
    %1681 = vmatpush1.bf16.msra.mxu0 0
    %1682 = vmatprep.subr.bf16.mxu0 0
    %1683 = vmatpush1.bf16.msra.mxu0 0
    %1684 = vmatprep.subr.bf16.mxu0 0
    %1685 = vmatpush1.bf16.msra.mxu0 0
    %1686 = vmatprep.subr.bf16.mxu0 0
    %1687 = vmatpush1.bf16.msra.mxu0 0
    %1688 = vmatprep.subr.bf16.mxu0 0
    %1689 = vmatpush1.bf16.msra.mxu0 0
    %1690 = vmatprep.subr.bf16.mxu0 0
    %1691 = vmatpush1.bf16.msra.mxu0 0
    %1692 = vmatprep.subr.bf16.mxu0 0
    %1693 = vmatpush1.bf16.msra.mxu0 0
    %1694 = vmatprep.mubr.bf16.mxu0 0
    %1695 = vmatmul.mubr.bf16.gmra.mrb[0].mxu0 %v1660
    %v1696 = vpop.f32.mrb[0].mxu0
    %v1697 = vadd.f32 0.0, %v1696
    %v1698 = vpop.f32.mrb[0].mxu0
    %v1699 = vpop.f32.mrb[0].mxu0
    %v1700 = vpop.f32.mrb[0].mxu0
    %1701 = vdwg.mxu0
    %v1702 = vadd.f32 %v1651, %v1697
    %v1703 = vxor.u32 %v1702, 2147483648
    %v1704 = vmul.f32 %v1703, 1.442695
    %v1705 = vpow.pop %v1704
    %v1706 = vadd.f32 %v1705, 1.0
    %v1707 = vrcp.pop %v1706
    %v1708 = vmul.f32 1.0, %v1707
    %v1709 = vtanh.pop %v1702
    %v1710 = vmul.f32 %v1708, %v1521
    %1712 = vrot.lane.b32.xlu0 %v1709, 64
    %v1713 = vpop.permute.xlu0 %1712
    %v1715 = vmul.f32 %v1708, %v1713
    %1717 = vrot.lane.b32.xlu0 %v1715, 32
    %v1718 = vpop.permute.xlu0 %1717
    %v1720 = vadd.f32 %v1710, %v1718
    %v1721 = vtanh.pop %v1720
    %1723 = vrot.lane.b32.xlu0 %v1721, 64
    %v1724 = vpop.permute.xlu0 %1723
    %v1726 = vmul.f32 %v1708, %v1724
    %1728 = vrot.lane.b32.xlu0 %v1726, 32
    %v1729 = vpop.permute.xlu0 %1728
    %1731 = vst.msk [vmem:[#allocation2 + $0x7] sm:$0x1] %vm344, %v1729
    %v1732 = vld [vmem:[#allocation2] sm:$0xff]
    %v1733 = vpack.c.bf16 %v1732, %v1732
    %v1738 = vunpack.c.l.b16 %v43
    %v1739 = vunpack.c.l.b16 %v44
    %v1740 = vunpack.c.l.b16 %v45
    %v1741 = vunpack.c.l.b16 %v46
    %v1742 = vpack.c.b16 %v1739, %v1738
    %v1743 = vpack.c.b16 %v1741, %v1740
    %v1747 = vsel %vm122, %v1733, 0
    %1749 = vmatprep.subr.bf16.mxu0 0
    %1750 = vmatpush1.bf16.msra.mxu0 %v1742
    %1751 = vmatprep.subr.bf16.mxu0 0
    %1752 = vmatpush1.bf16.msra.mxu0 %v1743
    %1753 = vmatprep.subr.bf16.mxu0 0
    %1754 = vmatpush1.bf16.msra.mxu0 0
    %1755 = vmatprep.subr.bf16.mxu0 0
    %1756 = vmatpush1.bf16.msra.mxu0 0
    %1757 = vmatprep.subr.bf16.mxu0 0
    %1758 = vmatpush1.bf16.msra.mxu0 0
    %1759 = vmatprep.subr.bf16.mxu0 0
    %1760 = vmatpush1.bf16.msra.mxu0 0
    %1761 = vmatprep.subr.bf16.mxu0 0
    %1762 = vmatpush1.bf16.msra.mxu0 0
    %1763 = vmatprep.subr.bf16.mxu0 0
    %1764 = vmatpush1.bf16.msra.mxu0 0
    %1765 = vmatprep.subr.bf16.mxu0 0
    %1766 = vmatpush1.bf16.msra.mxu0 0
    %1767 = vmatprep.subr.bf16.mxu0 0
    %1768 = vmatpush1.bf16.msra.mxu0 0
    %1769 = vmatprep.subr.bf16.mxu0 0
    %1770 = vmatpush1.bf16.msra.mxu0 0
    %1771 = vmatprep.subr.bf16.mxu0 0
    %1772 = vmatpush1.bf16.msra.mxu0 0
    %1773 = vmatprep.subr.bf16.mxu0 0
    %1774 = vmatpush1.bf16.msra.mxu0 0
    %1775 = vmatprep.subr.bf16.mxu0 0
    %1776 = vmatpush1.bf16.msra.mxu0 0
    %1777 = vmatprep.subr.bf16.mxu0 0
    %1778 = vmatpush1.bf16.msra.mxu0 0
    %1779 = vmatprep.subr.bf16.mxu0 0
    %1780 = vmatpush1.bf16.msra.mxu0 0
    %1781 = vmatprep.mubr.bf16.mxu0 0
    %1782 = vmatmul.mubr.bf16.gmra.mrb[0].mxu0 %v1747
    %v1783 = vpop.f32.mrb[0].mxu0
    %v1784 = vadd.f32 0.0, %v1783
    %v1785 = vpop.f32.mrb[0].mxu0
    %v1786 = vpop.f32.mrb[0].mxu0
    %v1787 = vpop.f32.mrb[0].mxu0
    %1788 = vdwg.mxu0
    %v1789 = vlaneseq
    %v1790 = vshrl.u32 %v1789, 7
    %v1791 = vsub.s32 0, %v1790
    %v1792 = vrot.slane %v53, %v1791
    %v1793 = vadd.f32 %v1784, %v1792
    %v1794 = vxor.u32 %v1793, 2147483648
    %v1795 = vmul.f32 %v1794, 1.442695
    %v1796 = vpow.pop %v1795
    %v1797 = vadd.f32 %v1796, 1.0
    %v1798 = vrcp.pop %v1797
    %v1799 = vmul.f32 1.0, %v1798
    %vm1800 = vcmask 7168
    %1801 = vst.msk [vmem:[%s3] sm:$0xff] %vm1800, %v1799
    %v1802 = vsub.f32 1.0, %v1799
    %1804 = vrot.lane.b32.xlu0 %v1802, 1
    %v1805 = vpop.permute.xlu0 %1804
    %vm1807 = vcmask 15368
    %1808 = vst.msk [vmem:[%s3] sm:$0xff] %vm1807, %v1805
    // Predicated region
    $region18: #{simple_rnn_forward.1} parent=1 // pred_check
      _
    $region19: #{simple_rnn_forward.1} parent=1 // pred_check_branch
      %1810 = sbr.rel (0) target = $region21
    $region20: #{simple_rnn_forward.1} parent=1 // pred_region
      _
    $region21: #{simple_rnn_forward.1} parent=1 // pred_fallthru
      _
    // Predicated region
    $region22: #{simple_rnn_forward.1} parent=1 // pred_check
      _
    $region23: #{simple_rnn_forward.1} parent=1 // pred_check_branch
      %1812 = sbr.rel (0) target = $region25
    $region24: #{simple_rnn_forward.1} parent=1 // pred_region
      _
    $region25: #{simple_rnn_forward.1} parent=1 // pred_fallthru
      _
    %1813 = vsyncpa [#allocation4], 1

</llo_original>
